<compile_context>
chip_gen: v5e
topology: v5e:2x2
jax: 0.10.0
libtpu: 0.0.40
codegen_flags: <defaults>
</compile_context>

<pallas_src>
import jax
import jax.numpy as jnp
from jax.experimental import pallas as pl
from jax.experimental.pallas import tpu as pltpu

K = 5          # kernel size
P = 2          # padding


def _conv5x5_pair_kernel(x_ref, g_ref, wb_ref, o1_ref, o2_ref):
    # x_ref, g_ref   : (N, 1, H, W) VMEM  input images for conv1 / conv2
    # wb_ref         : (2*K*K + 2,) SMEM  [w1 flat (25) | w2 flat (25) | b1 | b2]
    # o1_ref, o2_ref : (N, 1, H, W) VMEM  outputs
    N, _, H, W = o1_ref.shape
    Wp = W + 2 * P

    def conv_one(xin, base, bias):
        # Zero-pad in registers (no scratch store/reload round trip).
        zc = jnp.zeros((N, H, P), jnp.float32)
        xp = jnp.concatenate([zc, xin, zc], axis=-1)          # (N, H,   W+4)
        zr = jnp.zeros((N, P, Wp), jnp.float32)
        xp = jnp.concatenate([zr, xp, zr], axis=-2)           # (N, H+4, W+4)

        # Bias folded into the accumulator init (saves an epilogue add pass).
        acc = jnp.full((N, H, W), bias, jnp.float32)
        # 25 statically-unrolled shifted multiply-adds on the VPU.
        # Lane (dx) shifts hoisted out of the dy loop: 5 lane slices total,
        # only cheap sublane slices inside.
        for dx in range(K):
            xs = xp[:, :, dx:dx + W]                          # (N, H+4, W)
            for dy in range(K):
                w_tap = wb_ref[base + dy * K + dx]            # SMEM scalar read
                acc = acc + xs[:, dy:dy + H, :] * w_tap
        return acc

    x = x_ref[...].reshape(N, H, W).astype(jnp.float32)
    g = g_ref[...].reshape(N, H, W).astype(jnp.float32)

    y1 = conv_one(x, 0, wb_ref[2 * K * K + 0])
    y2 = conv_one(g, K * K, wb_ref[2 * K * K + 1])

    o1_ref[...] = y1.reshape(N, 1, H, W).astype(o1_ref.dtype)
    o2_ref[...] = y2.reshape(N, 1, H, W).astype(o2_ref.dtype)


def model_sub_forward(x_nchw, weight_nchw, params):
    """Mirrors ModelSub.forward: (conv1(x), conv2(weight)), 'same' 5x5 conv."""
    N, C, H, W = x_nchw.shape
    assert C == 1, "ModelSub uses in_channels=1"

    wb = jnp.concatenate([
        params["conv1_w"].reshape(-1),
        params["conv2_w"].reshape(-1),
        params["conv1_b"].reshape(-1),
        params["conv2_b"].reshape(-1),
    ]).astype(jnp.float32)                                     # (52,)

    vmem = pl.BlockSpec(memory_space=pltpu.MemorySpace.VMEM)
    smem = pl.BlockSpec(memory_space=pltpu.MemorySpace.SMEM)

    y1, y2 = pl.pallas_call(
        _conv5x5_pair_kernel,
        out_shape=(jax.ShapeDtypeStruct((N, 1, H, W), jnp.float32),
                   jax.ShapeDtypeStruct((N, 1, H, W), jnp.float32)),
        in_specs=[vmem, vmem, smem],
        out_specs=(vmem, vmem),
    )(x_nchw.astype(jnp.float32), weight_nchw.astype(jnp.float32), wb)
    return y1, y2


def init_params(key):
    """Deterministic init matching PyTorch Conv2d default (uniform +-1/sqrt(fan_in))."""
    fan_in = 1 * K * K
    bound = 1.0 / (fan_in ** 0.5)
    k1, k2, k3, k4 = jax.random.split(key, 4)
    return {
        "conv1_w": jax.random.uniform(k1, (K, K), jnp.float32, -bound, bound),
        "conv1_b": jax.random.uniform(k2, (1,), jnp.float32, -bound, bound),
        "conv2_w": jax.random.uniform(k3, (K, K), jnp.float32, -bound, bound),
        "conv2_b": jax.random.uniform(k4, (1,), jnp.float32, -bound, bound),
    }


if __name__ == "__main__":
    key = jax.random.PRNGKey(0)
    kx, kw, kp = jax.random.split(key, 3)

    N, C, H, W = 2, 1, 16, 16
    x = jax.random.normal(kx, (N, C, H, W), jnp.float32)
    weight = jax.random.normal(kw, (N, C, H, W), jnp.float32)
    params = init_params(kp)

    y1, y2 = model_sub_forward(x, weight, params)
    jax.block_until_ready((y1, y2))

    # Reference check against XLA conv for correctness.
    def ref_conv(inp, w, b):
        w4 = w.reshape(1, 1, K, K)
        out = jax.lax.conv_general_dilated(
            inp, w4, window_strides=(1, 1), padding=((P, P), (P, P)),
            dimension_numbers=("NCHW", "OIHW", "NCHW"))
        return out + b.reshape(1, 1, 1, 1)

    r1 = ref_conv(x, params["conv1_w"], params["conv1_b"])
    r2 = ref_conv(weight, params["conv2_w"], params["conv2_b"])
    assert jnp.allclose(y1, r1, atol=1e-5, rtol=1e-5), "conv1 mismatch"
    assert jnp.allclose(y2, r2, atol=1e-5, rtol=1e-5), "conv2 mismatch"

    print("KERNEL_OK")
</pallas_src>

<mosaic_0001>
module attributes {stable_mosaic.version = 11 : i64} {
  func.func @_conv5x5_pair_kernel(%arg0: memref<2x1x16x16xf32, #tpu.memory_space<vmem>>, %arg1: memref<2x1x16x16xf32, #tpu.memory_space<vmem>>, %arg2: memref<52xf32, #tpu.memory_space<smem>>, %arg3: memref<2x1x16x16xf32, #tpu.memory_space<vmem>>, %arg4: memref<2x1x16x16xf32, #tpu.memory_space<vmem>>) attributes {dimension_semantics = [], scalar_prefetch = 0 : i64, scratch_operands = 0 : i64, tpu.core_type = #tpu.core_type<tc>} {
    %c0 = arith.constant 0 : index
    %c0_0 = arith.constant 0 : index
    %c0_1 = arith.constant 0 : index
    %c0_2 = arith.constant 0 : index
    %0 = vector.load %arg0[%c0, %c0_0, %c0_1, %c0_2] : memref<2x1x16x16xf32, #tpu.memory_space<vmem>>, vector<2x1x16x16xf32>
    %1 = vector.shape_cast %0 : vector<2x1x16x16xf32> to vector<2x16x16xf32>
    %c0_3 = arith.constant 0 : index
    %c0_4 = arith.constant 0 : index
    %c0_5 = arith.constant 0 : index
    %c0_6 = arith.constant 0 : index
    %2 = vector.load %arg1[%c0_3, %c0_4, %c0_5, %c0_6] : memref<2x1x16x16xf32, #tpu.memory_space<vmem>>, vector<2x1x16x16xf32>
    %3 = vector.shape_cast %2 : vector<2x1x16x16xf32> to vector<2x16x16xf32>
    %c50 = arith.constant 50 : index
    %4 = memref.load %arg2[%c50] : memref<52xf32, #tpu.memory_space<smem>>
    %cst = arith.constant 0.000000e+00 : f32
    %5 = vector.broadcast %cst : f32 to vector<2x16x2xf32>
    %6 = tpu.concatenate %5, %1, %5 in 2 : vector<2x16x2xf32>, vector<2x16x16xf32>, vector<2x16x2xf32> -> vector<2x16x20xf32>
    %cst_7 = arith.constant 0.000000e+00 : f32
    %7 = vector.broadcast %cst_7 : f32 to vector<2x2x20xf32>
    %8 = tpu.concatenate %7, %6, %7 in 1 : vector<2x2x20xf32>, vector<2x16x20xf32>, vector<2x2x20xf32> -> vector<2x20x20xf32>
    %9 = vector.broadcast %4 : f32 to vector<2x16x16xf32>
    %10 = vector.extract_strided_slice %8 {offsets = [0, 0, 0], sizes = [2, 20, 16], strides = [1, 1, 1]} : vector<2x20x20xf32> to vector<2x20x16xf32>
    %c0_8 = arith.constant 0 : index
    %11 = memref.load %arg2[%c0_8] : memref<52xf32, #tpu.memory_space<smem>>
    %12 = vector.extract_strided_slice %10 {offsets = [0, 0, 0], sizes = [2, 16, 16], strides = [1, 1, 1]} : vector<2x20x16xf32> to vector<2x16x16xf32>
    %13 = vector.broadcast %11 : f32 to vector<2x16x16xf32>
    %14 = arith.mulf %12, %13 : vector<2x16x16xf32>
    %15 = arith.addf %9, %14 : vector<2x16x16xf32>
    %c5 = arith.constant 5 : index
    %16 = memref.load %arg2[%c5] : memref<52xf32, #tpu.memory_space<smem>>
    %17 = vector.extract_strided_slice %10 {offsets = [0, 1, 0], sizes = [2, 16, 16], strides = [1, 1, 1]} : vector<2x20x16xf32> to vector<2x16x16xf32>
    %18 = vector.broadcast %16 : f32 to vector<2x16x16xf32>
    %19 = arith.mulf %17, %18 : vector<2x16x16xf32>
    %20 = arith.addf %15, %19 : vector<2x16x16xf32>
    %c10 = arith.constant 10 : index
    %21 = memref.load %arg2[%c10] : memref<52xf32, #tpu.memory_space<smem>>
    %22 = vector.extract_strided_slice %10 {offsets = [0, 2, 0], sizes = [2, 16, 16], strides = [1, 1, 1]} : vector<2x20x16xf32> to vector<2x16x16xf32>
    %23 = vector.broadcast %21 : f32 to vector<2x16x16xf32>
    %24 = arith.mulf %22, %23 : vector<2x16x16xf32>
    %25 = arith.addf %20, %24 : vector<2x16x16xf32>
    %c15 = arith.constant 15 : index
    %26 = memref.load %arg2[%c15] : memref<52xf32, #tpu.memory_space<smem>>
    %27 = vector.extract_strided_slice %10 {offsets = [0, 3, 0], sizes = [2, 16, 16], strides = [1, 1, 1]} : vector<2x20x16xf32> to vector<2x16x16xf32>
    %28 = vector.broadcast %26 : f32 to vector<2x16x16xf32>
    %29 = arith.mulf %27, %28 : vector<2x16x16xf32>
    %30 = arith.addf %25, %29 : vector<2x16x16xf32>
    %c20 = arith.constant 20 : index
    %31 = memref.load %arg2[%c20] : memref<52xf32, #tpu.memory_space<smem>>
    %32 = vector.extract_strided_slice %10 {offsets = [0, 4, 0], sizes = [2, 16, 16], strides = [1, 1, 1]} : vector<2x20x16xf32> to vector<2x16x16xf32>
    %33 = vector.broadcast %31 : f32 to vector<2x16x16xf32>
    %34 = arith.mulf %32, %33 : vector<2x16x16xf32>
    %35 = arith.addf %30, %34 : vector<2x16x16xf32>
    %36 = vector.extract_strided_slice %8 {offsets = [0, 0, 1], sizes = [2, 20, 16], strides = [1, 1, 1]} : vector<2x20x20xf32> to vector<2x20x16xf32>
    %c1 = arith.constant 1 : index
    %37 = memref.load %arg2[%c1] : memref<52xf32, #tpu.memory_space<smem>>
    %38 = vector.extract_strided_slice %36 {offsets = [0, 0, 0], sizes = [2, 16, 16], strides = [1, 1, 1]} : vector<2x20x16xf32> to vector<2x16x16xf32>
    %39 = vector.broadcast %37 : f32 to vector<2x16x16xf32>
    %40 = arith.mulf %38, %39 : vector<2x16x16xf32>
    %41 = arith.addf %35, %40 : vector<2x16x16xf32>
    %c6 = arith.constant 6 : index
    %42 = memref.load %arg2[%c6] : memref<52xf32, #tpu.memory_space<smem>>
    %43 = vector.extract_strided_slice %36 {offsets = [0, 1, 0], sizes = [2, 16, 16], strides = [1, 1, 1]} : vector<2x20x16xf32> to vector<2x16x16xf32>
    %44 = vector.broadcast %42 : f32 to vector<2x16x16xf32>
    %45 = arith.mulf %43, %44 : vector<2x16x16xf32>
    %46 = arith.addf %41, %45 : vector<2x16x16xf32>
    %c11 = arith.constant 11 : index
    %47 = memref.load %arg2[%c11] : memref<52xf32, #tpu.memory_space<smem>>
    %48 = vector.extract_strided_slice %36 {offsets = [0, 2, 0], sizes = [2, 16, 16], strides = [1, 1, 1]} : vector<2x20x16xf32> to vector<2x16x16xf32>
    %49 = vector.broadcast %47 : f32 to vector<2x16x16xf32>
    %50 = arith.mulf %48, %49 : vector<2x16x16xf32>
    %51 = arith.addf %46, %50 : vector<2x16x16xf32>
    %c16 = arith.constant 16 : index
    %52 = memref.load %arg2[%c16] : memref<52xf32, #tpu.memory_space<smem>>
    %53 = vector.extract_strided_slice %36 {offsets = [0, 3, 0], sizes = [2, 16, 16], strides = [1, 1, 1]} : vector<2x20x16xf32> to vector<2x16x16xf32>
    %54 = vector.broadcast %52 : f32 to vector<2x16x16xf32>
    %55 = arith.mulf %53, %54 : vector<2x16x16xf32>
    %56 = arith.addf %51, %55 : vector<2x16x16xf32>
    %c21 = arith.constant 21 : index
    %57 = memref.load %arg2[%c21] : memref<52xf32, #tpu.memory_space<smem>>
    %58 = vector.extract_strided_slice %36 {offsets = [0, 4, 0], sizes = [2, 16, 16], strides = [1, 1, 1]} : vector<2x20x16xf32> to vector<2x16x16xf32>
    %59 = vector.broadcast %57 : f32 to vector<2x16x16xf32>
    %60 = arith.mulf %58, %59 : vector<2x16x16xf32>
    %61 = arith.addf %56, %60 : vector<2x16x16xf32>
    %62 = vector.extract_strided_slice %8 {offsets = [0, 0, 2], sizes = [2, 20, 16], strides = [1, 1, 1]} : vector<2x20x20xf32> to vector<2x20x16xf32>
    %c2 = arith.constant 2 : index
    %63 = memref.load %arg2[%c2] : memref<52xf32, #tpu.memory_space<smem>>
    %64 = vector.extract_strided_slice %62 {offsets = [0, 0, 0], sizes = [2, 16, 16], strides = [1, 1, 1]} : vector<2x20x16xf32> to vector<2x16x16xf32>
    %65 = vector.broadcast %63 : f32 to vector<2x16x16xf32>
    %66 = arith.mulf %64, %65 : vector<2x16x16xf32>
    %67 = arith.addf %61, %66 : vector<2x16x16xf32>
    %c7 = arith.constant 7 : index
    %68 = memref.load %arg2[%c7] : memref<52xf32, #tpu.memory_space<smem>>
    %69 = vector.extract_strided_slice %62 {offsets = [0, 1, 0], sizes = [2, 16, 16], strides = [1, 1, 1]} : vector<2x20x16xf32> to vector<2x16x16xf32>
    %70 = vector.broadcast %68 : f32 to vector<2x16x16xf32>
    %71 = arith.mulf %69, %70 : vector<2x16x16xf32>
    %72 = arith.addf %67, %71 : vector<2x16x16xf32>
    %c12 = arith.constant 12 : index
    %73 = memref.load %arg2[%c12] : memref<52xf32, #tpu.memory_space<smem>>
    %74 = vector.extract_strided_slice %62 {offsets = [0, 2, 0], sizes = [2, 16, 16], strides = [1, 1, 1]} : vector<2x20x16xf32> to vector<2x16x16xf32>
    %75 = vector.broadcast %73 : f32 to vector<2x16x16xf32>
    %76 = arith.mulf %74, %75 : vector<2x16x16xf32>
    %77 = arith.addf %72, %76 : vector<2x16x16xf32>
    %c17 = arith.constant 17 : index
    %78 = memref.load %arg2[%c17] : memref<52xf32, #tpu.memory_space<smem>>
    %79 = vector.extract_strided_slice %62 {offsets = [0, 3, 0], sizes = [2, 16, 16], strides = [1, 1, 1]} : vector<2x20x16xf32> to vector<2x16x16xf32>
    %80 = vector.broadcast %78 : f32 to vector<2x16x16xf32>
    %81 = arith.mulf %79, %80 : vector<2x16x16xf32>
    %82 = arith.addf %77, %81 : vector<2x16x16xf32>
    %c22 = arith.constant 22 : index
    %83 = memref.load %arg2[%c22] : memref<52xf32, #tpu.memory_space<smem>>
    %84 = vector.extract_strided_slice %62 {offsets = [0, 4, 0], sizes = [2, 16, 16], strides = [1, 1, 1]} : vector<2x20x16xf32> to vector<2x16x16xf32>
    %85 = vector.broadcast %83 : f32 to vector<2x16x16xf32>
    %86 = arith.mulf %84, %85 : vector<2x16x16xf32>
    %87 = arith.addf %82, %86 : vector<2x16x16xf32>
    %88 = vector.extract_strided_slice %8 {offsets = [0, 0, 3], sizes = [2, 20, 16], strides = [1, 1, 1]} : vector<2x20x20xf32> to vector<2x20x16xf32>
    %c3 = arith.constant 3 : index
    %89 = memref.load %arg2[%c3] : memref<52xf32, #tpu.memory_space<smem>>
    %90 = vector.extract_strided_slice %88 {offsets = [0, 0, 0], sizes = [2, 16, 16], strides = [1, 1, 1]} : vector<2x20x16xf32> to vector<2x16x16xf32>
    %91 = vector.broadcast %89 : f32 to vector<2x16x16xf32>
    %92 = arith.mulf %90, %91 : vector<2x16x16xf32>
    %93 = arith.addf %87, %92 : vector<2x16x16xf32>
    %c8 = arith.constant 8 : index
    %94 = memref.load %arg2[%c8] : memref<52xf32, #tpu.memory_space<smem>>
    %95 = vector.extract_strided_slice %88 {offsets = [0, 1, 0], sizes = [2, 16, 16], strides = [1, 1, 1]} : vector<2x20x16xf32> to vector<2x16x16xf32>
    %96 = vector.broadcast %94 : f32 to vector<2x16x16xf32>
    %97 = arith.mulf %95, %96 : vector<2x16x16xf32>
    %98 = arith.addf %93, %97 : vector<2x16x16xf32>
    %c13 = arith.constant 13 : index
    %99 = memref.load %arg2[%c13] : memref<52xf32, #tpu.memory_space<smem>>
    %100 = vector.extract_strided_slice %88 {offsets = [0, 2, 0], sizes = [2, 16, 16], strides = [1, 1, 1]} : vector<2x20x16xf32> to vector<2x16x16xf32>
    %101 = vector.broadcast %99 : f32 to vector<2x16x16xf32>
    %102 = arith.mulf %100, %101 : vector<2x16x16xf32>
    %103 = arith.addf %98, %102 : vector<2x16x16xf32>
    %c18 = arith.constant 18 : index
    %104 = memref.load %arg2[%c18] : memref<52xf32, #tpu.memory_space<smem>>
    %105 = vector.extract_strided_slice %88 {offsets = [0, 3, 0], sizes = [2, 16, 16], strides = [1, 1, 1]} : vector<2x20x16xf32> to vector<2x16x16xf32>
    %106 = vector.broadcast %104 : f32 to vector<2x16x16xf32>
    %107 = arith.mulf %105, %106 : vector<2x16x16xf32>
    %108 = arith.addf %103, %107 : vector<2x16x16xf32>
    %c23 = arith.constant 23 : index
    %109 = memref.load %arg2[%c23] : memref<52xf32, #tpu.memory_space<smem>>
    %110 = vector.extract_strided_slice %88 {offsets = [0, 4, 0], sizes = [2, 16, 16], strides = [1, 1, 1]} : vector<2x20x16xf32> to vector<2x16x16xf32>
    %111 = vector.broadcast %109 : f32 to vector<2x16x16xf32>
    %112 = arith.mulf %110, %111 : vector<2x16x16xf32>
    %113 = arith.addf %108, %112 : vector<2x16x16xf32>
    %114 = vector.extract_strided_slice %8 {offsets = [0, 0, 4], sizes = [2, 20, 16], strides = [1, 1, 1]} : vector<2x20x20xf32> to vector<2x20x16xf32>
    %c4 = arith.constant 4 : index
    %115 = memref.load %arg2[%c4] : memref<52xf32, #tpu.memory_space<smem>>
    %116 = vector.extract_strided_slice %114 {offsets = [0, 0, 0], sizes = [2, 16, 16], strides = [1, 1, 1]} : vector<2x20x16xf32> to vector<2x16x16xf32>
    %117 = vector.broadcast %115 : f32 to vector<2x16x16xf32>
    %118 = arith.mulf %116, %117 : vector<2x16x16xf32>
    %119 = arith.addf %113, %118 : vector<2x16x16xf32>
    %c9 = arith.constant 9 : index
    %120 = memref.load %arg2[%c9] : memref<52xf32, #tpu.memory_space<smem>>
    %121 = vector.extract_strided_slice %114 {offsets = [0, 1, 0], sizes = [2, 16, 16], strides = [1, 1, 1]} : vector<2x20x16xf32> to vector<2x16x16xf32>
    %122 = vector.broadcast %120 : f32 to vector<2x16x16xf32>
    %123 = arith.mulf %121, %122 : vector<2x16x16xf32>
    %124 = arith.addf %119, %123 : vector<2x16x16xf32>
    %c14 = arith.constant 14 : index
    %125 = memref.load %arg2[%c14] : memref<52xf32, #tpu.memory_space<smem>>
    %126 = vector.extract_strided_slice %114 {offsets = [0, 2, 0], sizes = [2, 16, 16], strides = [1, 1, 1]} : vector<2x20x16xf32> to vector<2x16x16xf32>
    %127 = vector.broadcast %125 : f32 to vector<2x16x16xf32>
    %128 = arith.mulf %126, %127 : vector<2x16x16xf32>
    %129 = arith.addf %124, %128 : vector<2x16x16xf32>
    %c19 = arith.constant 19 : index
    %130 = memref.load %arg2[%c19] : memref<52xf32, #tpu.memory_space<smem>>
    %131 = vector.extract_strided_slice %114 {offsets = [0, 3, 0], sizes = [2, 16, 16], strides = [1, 1, 1]} : vector<2x20x16xf32> to vector<2x16x16xf32>
    %132 = vector.broadcast %130 : f32 to vector<2x16x16xf32>
    %133 = arith.mulf %131, %132 : vector<2x16x16xf32>
    %134 = arith.addf %129, %133 : vector<2x16x16xf32>
    %c24 = arith.constant 24 : index
    %135 = memref.load %arg2[%c24] : memref<52xf32, #tpu.memory_space<smem>>
    %136 = vector.extract_strided_slice %114 {offsets = [0, 4, 0], sizes = [2, 16, 16], strides = [1, 1, 1]} : vector<2x20x16xf32> to vector<2x16x16xf32>
    %137 = vector.broadcast %135 : f32 to vector<2x16x16xf32>
    %138 = arith.mulf %136, %137 : vector<2x16x16xf32>
    %139 = arith.addf %134, %138 : vector<2x16x16xf32>
    %c51 = arith.constant 51 : index
    %140 = memref.load %arg2[%c51] : memref<52xf32, #tpu.memory_space<smem>>
    %cst_9 = arith.constant 0.000000e+00 : f32
    %141 = vector.broadcast %cst_9 : f32 to vector<2x16x2xf32>
    %142 = tpu.concatenate %141, %3, %141 in 2 : vector<2x16x2xf32>, vector<2x16x16xf32>, vector<2x16x2xf32> -> vector<2x16x20xf32>
    %cst_10 = arith.constant 0.000000e+00 : f32
    %143 = vector.broadcast %cst_10 : f32 to vector<2x2x20xf32>
    %144 = tpu.concatenate %143, %142, %143 in 1 : vector<2x2x20xf32>, vector<2x16x20xf32>, vector<2x2x20xf32> -> vector<2x20x20xf32>
    %145 = vector.broadcast %140 : f32 to vector<2x16x16xf32>
    %146 = vector.extract_strided_slice %144 {offsets = [0, 0, 0], sizes = [2, 20, 16], strides = [1, 1, 1]} : vector<2x20x20xf32> to vector<2x20x16xf32>
    %c25 = arith.constant 25 : index
    %147 = memref.load %arg2[%c25] : memref<52xf32, #tpu.memory_space<smem>>
    %148 = vector.extract_strided_slice %146 {offsets = [0, 0, 0], sizes = [2, 16, 16], strides = [1, 1, 1]} : vector<2x20x16xf32> to vector<2x16x16xf32>
    %149 = vector.broadcast %147 : f32 to vector<2x16x16xf32>
    %150 = arith.mulf %148, %149 : vector<2x16x16xf32>
    %151 = arith.addf %145, %150 : vector<2x16x16xf32>
    %c30 = arith.constant 30 : index
    %152 = memref.load %arg2[%c30] : memref<52xf32, #tpu.memory_space<smem>>
    %153 = vector.extract_strided_slice %146 {offsets = [0, 1, 0], sizes = [2, 16, 16], strides = [1, 1, 1]} : vector<2x20x16xf32> to vector<2x16x16xf32>
    %154 = vector.broadcast %152 : f32 to vector<2x16x16xf32>
    %155 = arith.mulf %153, %154 : vector<2x16x16xf32>
    %156 = arith.addf %151, %155 : vector<2x16x16xf32>
    %c35 = arith.constant 35 : index
    %157 = memref.load %arg2[%c35] : memref<52xf32, #tpu.memory_space<smem>>
    %158 = vector.extract_strided_slice %146 {offsets = [0, 2, 0], sizes = [2, 16, 16], strides = [1, 1, 1]} : vector<2x20x16xf32> to vector<2x16x16xf32>
    %159 = vector.broadcast %157 : f32 to vector<2x16x16xf32>
    %160 = arith.mulf %158, %159 : vector<2x16x16xf32>
    %161 = arith.addf %156, %160 : vector<2x16x16xf32>
    %c40 = arith.constant 40 : index
    %162 = memref.load %arg2[%c40] : memref<52xf32, #tpu.memory_space<smem>>
    %163 = vector.extract_strided_slice %146 {offsets = [0, 3, 0], sizes = [2, 16, 16], strides = [1, 1, 1]} : vector<2x20x16xf32> to vector<2x16x16xf32>
    %164 = vector.broadcast %162 : f32 to vector<2x16x16xf32>
    %165 = arith.mulf %163, %164 : vector<2x16x16xf32>
    %166 = arith.addf %161, %165 : vector<2x16x16xf32>
    %c45 = arith.constant 45 : index
    %167 = memref.load %arg2[%c45] : memref<52xf32, #tpu.memory_space<smem>>
    %168 = vector.extract_strided_slice %146 {offsets = [0, 4, 0], sizes = [2, 16, 16], strides = [1, 1, 1]} : vector<2x20x16xf32> to vector<2x16x16xf32>
    %169 = vector.broadcast %167 : f32 to vector<2x16x16xf32>
    %170 = arith.mulf %168, %169 : vector<2x16x16xf32>
    %171 = arith.addf %166, %170 : vector<2x16x16xf32>
    %172 = vector.extract_strided_slice %144 {offsets = [0, 0, 1], sizes = [2, 20, 16], strides = [1, 1, 1]} : vector<2x20x20xf32> to vector<2x20x16xf32>
    %c26 = arith.constant 26 : index
    %173 = memref.load %arg2[%c26] : memref<52xf32, #tpu.memory_space<smem>>
    %174 = vector.extract_strided_slice %172 {offsets = [0, 0, 0], sizes = [2, 16, 16], strides = [1, 1, 1]} : vector<2x20x16xf32> to vector<2x16x16xf32>
    %175 = vector.broadcast %173 : f32 to vector<2x16x16xf32>
    %176 = arith.mulf %174, %175 : vector<2x16x16xf32>
    %177 = arith.addf %171, %176 : vector<2x16x16xf32>
    %c31 = arith.constant 31 : index
    %178 = memref.load %arg2[%c31] : memref<52xf32, #tpu.memory_space<smem>>
    %179 = vector.extract_strided_slice %172 {offsets = [0, 1, 0], sizes = [2, 16, 16], strides = [1, 1, 1]} : vector<2x20x16xf32> to vector<2x16x16xf32>
    %180 = vector.broadcast %178 : f32 to vector<2x16x16xf32>
    %181 = arith.mulf %179, %180 : vector<2x16x16xf32>
    %182 = arith.addf %177, %181 : vector<2x16x16xf32>
    %c36 = arith.constant 36 : index
    %183 = memref.load %arg2[%c36] : memref<52xf32, #tpu.memory_space<smem>>
    %184 = vector.extract_strided_slice %172 {offsets = [0, 2, 0], sizes = [2, 16, 16], strides = [1, 1, 1]} : vector<2x20x16xf32> to vector<2x16x16xf32>
    %185 = vector.broadcast %183 : f32 to vector<2x16x16xf32>
    %186 = arith.mulf %184, %185 : vector<2x16x16xf32>
    %187 = arith.addf %182, %186 : vector<2x16x16xf32>
    %c41 = arith.constant 41 : index
    %188 = memref.load %arg2[%c41] : memref<52xf32, #tpu.memory_space<smem>>
    %189 = vector.extract_strided_slice %172 {offsets = [0, 3, 0], sizes = [2, 16, 16], strides = [1, 1, 1]} : vector<2x20x16xf32> to vector<2x16x16xf32>
    %190 = vector.broadcast %188 : f32 to vector<2x16x16xf32>
    %191 = arith.mulf %189, %190 : vector<2x16x16xf32>
    %192 = arith.addf %187, %191 : vector<2x16x16xf32>
    %c46 = arith.constant 46 : index
    %193 = memref.load %arg2[%c46] : memref<52xf32, #tpu.memory_space<smem>>
    %194 = vector.extract_strided_slice %172 {offsets = [0, 4, 0], sizes = [2, 16, 16], strides = [1, 1, 1]} : vector<2x20x16xf32> to vector<2x16x16xf32>
    %195 = vector.broadcast %193 : f32 to vector<2x16x16xf32>
    %196 = arith.mulf %194, %195 : vector<2x16x16xf32>
    %197 = arith.addf %192, %196 : vector<2x16x16xf32>
    %198 = vector.extract_strided_slice %144 {offsets = [0, 0, 2], sizes = [2, 20, 16], strides = [1, 1, 1]} : vector<2x20x20xf32> to vector<2x20x16xf32>
    %c27 = arith.constant 27 : index
    %199 = memref.load %arg2[%c27] : memref<52xf32, #tpu.memory_space<smem>>
    %200 = vector.extract_strided_slice %198 {offsets = [0, 0, 0], sizes = [2, 16, 16], strides = [1, 1, 1]} : vector<2x20x16xf32> to vector<2x16x16xf32>
    %201 = vector.broadcast %199 : f32 to vector<2x16x16xf32>
    %202 = arith.mulf %200, %201 : vector<2x16x16xf32>
    %203 = arith.addf %197, %202 : vector<2x16x16xf32>
    %c32 = arith.constant 32 : index
    %204 = memref.load %arg2[%c32] : memref<52xf32, #tpu.memory_space<smem>>
    %205 = vector.extract_strided_slice %198 {offsets = [0, 1, 0], sizes = [2, 16, 16], strides = [1, 1, 1]} : vector<2x20x16xf32> to vector<2x16x16xf32>
    %206 = vector.broadcast %204 : f32 to vector<2x16x16xf32>
    %207 = arith.mulf %205, %206 : vector<2x16x16xf32>
    %208 = arith.addf %203, %207 : vector<2x16x16xf32>
    %c37 = arith.constant 37 : index
    %209 = memref.load %arg2[%c37] : memref<52xf32, #tpu.memory_space<smem>>
    %210 = vector.extract_strided_slice %198 {offsets = [0, 2, 0], sizes = [2, 16, 16], strides = [1, 1, 1]} : vector<2x20x16xf32> to vector<2x16x16xf32>
    %211 = vector.broadcast %209 : f32 to vector<2x16x16xf32>
    %212 = arith.mulf %210, %211 : vector<2x16x16xf32>
    %213 = arith.addf %208, %212 : vector<2x16x16xf32>
    %c42 = arith.constant 42 : index
    %214 = memref.load %arg2[%c42] : memref<52xf32, #tpu.memory_space<smem>>
    %215 = vector.extract_strided_slice %198 {offsets = [0, 3, 0], sizes = [2, 16, 16], strides = [1, 1, 1]} : vector<2x20x16xf32> to vector<2x16x16xf32>
    %216 = vector.broadcast %214 : f32 to vector<2x16x16xf32>
    %217 = arith.mulf %215, %216 : vector<2x16x16xf32>
    %218 = arith.addf %213, %217 : vector<2x16x16xf32>
    %c47 = arith.constant 47 : index
    %219 = memref.load %arg2[%c47] : memref<52xf32, #tpu.memory_space<smem>>
    %220 = vector.extract_strided_slice %198 {offsets = [0, 4, 0], sizes = [2, 16, 16], strides = [1, 1, 1]} : vector<2x20x16xf32> to vector<2x16x16xf32>
    %221 = vector.broadcast %219 : f32 to vector<2x16x16xf32>
    %222 = arith.mulf %220, %221 : vector<2x16x16xf32>
    %223 = arith.addf %218, %222 : vector<2x16x16xf32>
    %224 = vector.extract_strided_slice %144 {offsets = [0, 0, 3], sizes = [2, 20, 16], strides = [1, 1, 1]} : vector<2x20x20xf32> to vector<2x20x16xf32>
    %c28 = arith.constant 28 : index
    %225 = memref.load %arg2[%c28] : memref<52xf32, #tpu.memory_space<smem>>
    %226 = vector.extract_strided_slice %224 {offsets = [0, 0, 0], sizes = [2, 16, 16], strides = [1, 1, 1]} : vector<2x20x16xf32> to vector<2x16x16xf32>
    %227 = vector.broadcast %225 : f32 to vector<2x16x16xf32>
    %228 = arith.mulf %226, %227 : vector<2x16x16xf32>
    %229 = arith.addf %223, %228 : vector<2x16x16xf32>
    %c33 = arith.constant 33 : index
    %230 = memref.load %arg2[%c33] : memref<52xf32, #tpu.memory_space<smem>>
    %231 = vector.extract_strided_slice %224 {offsets = [0, 1, 0], sizes = [2, 16, 16], strides = [1, 1, 1]} : vector<2x20x16xf32> to vector<2x16x16xf32>
    %232 = vector.broadcast %230 : f32 to vector<2x16x16xf32>
    %233 = arith.mulf %231, %232 : vector<2x16x16xf32>
    %234 = arith.addf %229, %233 : vector<2x16x16xf32>
    %c38 = arith.constant 38 : index
    %235 = memref.load %arg2[%c38] : memref<52xf32, #tpu.memory_space<smem>>
    %236 = vector.extract_strided_slice %224 {offsets = [0, 2, 0], sizes = [2, 16, 16], strides = [1, 1, 1]} : vector<2x20x16xf32> to vector<2x16x16xf32>
    %237 = vector.broadcast %235 : f32 to vector<2x16x16xf32>
    %238 = arith.mulf %236, %237 : vector<2x16x16xf32>
    %239 = arith.addf %234, %238 : vector<2x16x16xf32>
    %c43 = arith.constant 43 : index
    %240 = memref.load %arg2[%c43] : memref<52xf32, #tpu.memory_space<smem>>
    %241 = vector.extract_strided_slice %224 {offsets = [0, 3, 0], sizes = [2, 16, 16], strides = [1, 1, 1]} : vector<2x20x16xf32> to vector<2x16x16xf32>
    %242 = vector.broadcast %240 : f32 to vector<2x16x16xf32>
    %243 = arith.mulf %241, %242 : vector<2x16x16xf32>
    %244 = arith.addf %239, %243 : vector<2x16x16xf32>
    %c48 = arith.constant 48 : index
    %245 = memref.load %arg2[%c48] : memref<52xf32, #tpu.memory_space<smem>>
    %246 = vector.extract_strided_slice %224 {offsets = [0, 4, 0], sizes = [2, 16, 16], strides = [1, 1, 1]} : vector<2x20x16xf32> to vector<2x16x16xf32>
    %247 = vector.broadcast %245 : f32 to vector<2x16x16xf32>
    %248 = arith.mulf %246, %247 : vector<2x16x16xf32>
    %249 = arith.addf %244, %248 : vector<2x16x16xf32>
    %250 = vector.extract_strided_slice %144 {offsets = [0, 0, 4], sizes = [2, 20, 16], strides = [1, 1, 1]} : vector<2x20x20xf32> to vector<2x20x16xf32>
    %c29 = arith.constant 29 : index
    %251 = memref.load %arg2[%c29] : memref<52xf32, #tpu.memory_space<smem>>
    %252 = vector.extract_strided_slice %250 {offsets = [0, 0, 0], sizes = [2, 16, 16], strides = [1, 1, 1]} : vector<2x20x16xf32> to vector<2x16x16xf32>
    %253 = vector.broadcast %251 : f32 to vector<2x16x16xf32>
    %254 = arith.mulf %252, %253 : vector<2x16x16xf32>
    %255 = arith.addf %249, %254 : vector<2x16x16xf32>
    %c34 = arith.constant 34 : index
    %256 = memref.load %arg2[%c34] : memref<52xf32, #tpu.memory_space<smem>>
    %257 = vector.extract_strided_slice %250 {offsets = [0, 1, 0], sizes = [2, 16, 16], strides = [1, 1, 1]} : vector<2x20x16xf32> to vector<2x16x16xf32>
    %258 = vector.broadcast %256 : f32 to vector<2x16x16xf32>
    %259 = arith.mulf %257, %258 : vector<2x16x16xf32>
    %260 = arith.addf %255, %259 : vector<2x16x16xf32>
    %c39 = arith.constant 39 : index
    %261 = memref.load %arg2[%c39] : memref<52xf32, #tpu.memory_space<smem>>
    %262 = vector.extract_strided_slice %250 {offsets = [0, 2, 0], sizes = [2, 16, 16], strides = [1, 1, 1]} : vector<2x20x16xf32> to vector<2x16x16xf32>
    %263 = vector.broadcast %261 : f32 to vector<2x16x16xf32>
    %264 = arith.mulf %262, %263 : vector<2x16x16xf32>
    %265 = arith.addf %260, %264 : vector<2x16x16xf32>
    %c44 = arith.constant 44 : index
    %266 = memref.load %arg2[%c44] : memref<52xf32, #tpu.memory_space<smem>>
    %267 = vector.extract_strided_slice %250 {offsets = [0, 3, 0], sizes = [2, 16, 16], strides = [1, 1, 1]} : vector<2x20x16xf32> to vector<2x16x16xf32>
    %268 = vector.broadcast %266 : f32 to vector<2x16x16xf32>
    %269 = arith.mulf %267, %268 : vector<2x16x16xf32>
    %270 = arith.addf %265, %269 : vector<2x16x16xf32>
    %c49 = arith.constant 49 : index
    %271 = memref.load %arg2[%c49] : memref<52xf32, #tpu.memory_space<smem>>
    %272 = vector.extract_strided_slice %250 {offsets = [0, 4, 0], sizes = [2, 16, 16], strides = [1, 1, 1]} : vector<2x20x16xf32> to vector<2x16x16xf32>
    %273 = vector.broadcast %271 : f32 to vector<2x16x16xf32>
    %274 = arith.mulf %272, %273 : vector<2x16x16xf32>
    %275 = arith.addf %270, %274 : vector<2x16x16xf32>
    %276 = vector.shape_cast %139 : vector<2x16x16xf32> to vector<2x1x16x16xf32>
    %c0_11 = arith.constant 0 : index
    %c0_12 = arith.constant 0 : index
    %c0_13 = arith.constant 0 : index
    %c0_14 = arith.constant 0 : index
    %277 = vector.load %arg3[%c0_11, %c0_12, %c0_13, %c0_14] : memref<2x1x16x16xf32, #tpu.memory_space<vmem>>, vector<2x1x16x16xf32>
    tpu.vector_store %arg3[%c0_11, %c0_12, %c0_13, %c0_14], %276 {strides = array<i32>} : memref<2x1x16x16xf32, #tpu.memory_space<vmem>>, vector<2x1x16x16xf32>,
    %278 = vector.shape_cast %275 : vector<2x16x16xf32> to vector<2x1x16x16xf32>
    %c0_15 = arith.constant 0 : index
    %c0_16 = arith.constant 0 : index
    %c0_17 = arith.constant 0 : index
    %c0_18 = arith.constant 0 : index
    %279 = vector.load %arg4[%c0_15, %c0_16, %c0_17, %c0_18] : memref<2x1x16x16xf32, #tpu.memory_space<vmem>>, vector<2x1x16x16xf32>
    tpu.vector_store %arg4[%c0_15, %c0_16, %c0_17, %c0_18], %278 {strides = array<i32>} : memref<2x1x16x16xf32, #tpu.memory_space<vmem>>, vector<2x1x16x16xf32>,
    return
  }
}

</mosaic_0001>

<llo_original>
// kernel: tpu_custom_call.1
$region0: #{tpu_custom_call.1}
  #allocation0 [shape = 'u32[]', space=smem, size = 0x4, offset = 0x4, fixed_abs, tag = 'smem constant byte address 0x4 - core index']
  #allocation1 [shape = 'u32[72,128]{1,0:T(1,128)}', space=vmem, size = 0x9000, scoped, tag = 'internal scratch']
  %s0 = inlined_call_operand.hbm [shape: f32[2,1,16,16], index: 0, kind: input, shape index: {}]
  %s1 = inlined_call_operand.hbm [shape: f32[2,1,16,16], index: 1, kind: input, shape index: {}]
  %s2 = inlined_call_operand.vmem [shape: f32[52], index: 2, kind: input, shape index: {}]
  %s3 = inlined_call_operand.hbm [shape: f32[2,1,16,16], index: 3, kind: output, shape index: {0}]
  %s4 = inlined_call_operand.hbm [shape: f32[2,1,16,16], index: 4, kind: output, shape index: {1}]
  %5 = xla_tuple %s3, %s4
  %s6 = sld [smem:[#allocation0]]
  $region42: #{tpu_custom_call.1} parent=0
    _
  %s8 = ssub.s32 1, %s6
  %s9 = scalar_select 0, %s8, %s6
  $region1: #{tpu_custom_call.1} parent=0
    #allocation2 [shape = 'u8[16384]{0}', space=vmem, size = 0x4000, scoped, tag = 'input window, operand 0, single buffered']
    #allocation3 [shape = 's32[1]{0}', space=sflag, size = 0x4, scoped, tag = 'scoped memory for tpu_custom_call.1']
    #allocation4 [shape = 's32[1]{0}', space=sflag, size = 0x4, scoped, tag = 'scoped memory for tpu_custom_call.1']
    #allocation5 [shape = 's32[1]{0}', space=sflag, size = 0x4, scoped, tag = 'scoped memory for tpu_custom_call.1']
    #allocation6 [shape = 'u8[16384]{0}', space=vmem, size = 0x4000, scoped, tag = 'input window, operand 1, single buffered']
    #allocation7 [shape = 's32[1]{0}', space=sflag, size = 0x4, scoped, tag = 'scoped memory for tpu_custom_call.1']
    #allocation8 [shape = 'u8[512]{0}', space=smem, size = 0x200, scoped, tag = 'input window, operand 2, single buffered']
    #allocation9 [shape = 'u8[16384]{0}', space=vmem, size = 0x4000, scoped, tag = 'output window, operand 0, single buffered']
    #allocation10 [shape = 'u8[16384]{0}', space=vmem, size = 0x4000, scoped, tag = 'output window, operand 1, single buffered']
    #allocation11 [shape = 's32[1]{0}', space=sflag, size = 0x4, scoped, tag = 'scoped memory for tpu_custom_call.1']
    %10 = vsyncpa [#allocation3], 0
    %11 = vsyncpa [#allocation7], 0
    %12 = vsyncpa [#allocation5], 0
    %13 = vsyncpa [#allocation4], 0
    %14 = vsyncpa [#allocation11], 0
    // Predicated region
    $region2: #{tpu_custom_call.1} parent=1 // pred_check
      _
    $region3: #{tpu_custom_call.1} parent=1 // pred_check_branch
      %16 = sbr.rel (0) target = $region5
    $region4: #{tpu_custom_call.1} parent=1 // pred_region
      %18 = vsyncadd [#allocation3], 0
      %s19 = sshll.u32 %s0, 4
      %s20 = int_to_ptr.hbm [resolvable:$true] %s19
      %s21 = sshll.u32 [#allocation2], 4
      %s22 = int_to_ptr.vmem [resolvable:$true] %s21
      %27 = dma.hbm_to_vmem [thread:$0]  %s20, 512, %s22, [#allocation3], 128, 128, 8
    $region5: #{tpu_custom_call.1} parent=1 // pred_fallthru
      _
    // Predicated region
    $region6: #{tpu_custom_call.1} parent=1 // pred_check
      _
    $region7: #{tpu_custom_call.1} parent=1 // pred_check_branch
      %29 = sbr.rel (0) target = $region9
    $region8: #{tpu_custom_call.1} parent=1 // pred_region
      %31 = vsyncadd [#allocation7], 0
      %s32 = sshll.u32 %s1, 4
      %s33 = int_to_ptr.hbm [resolvable:$true] %s32
      %s34 = sshll.u32 [#allocation6], 4
      %s35 = int_to_ptr.vmem [resolvable:$true] %s34
      %40 = dma.hbm_to_vmem [thread:$0]  %s33, 512, %s35, [#allocation7], 128, 128, 8
    $region9: #{tpu_custom_call.1} parent=1 // pred_fallthru
      _
    // Predicated region
    $region10: #{tpu_custom_call.1} parent=1 // pred_check
      _
    $region11: #{tpu_custom_call.1} parent=1 // pred_check_branch
      %42 = sbr.rel (0) target = $region13
    $region12: #{tpu_custom_call.1} parent=1 // pred_region
      %44 = vsyncadd [#allocation5], 0
      %s46 = sshll.u32 %s2, 4
      %s47 = int_to_ptr.vmem [resolvable:$true] %s46
      %49 = dma.vmem_to_smem %s47, 16, [#allocation8], [#allocation5]
    $region13: #{tpu_custom_call.1} parent=1 // pred_fallthru
      _
    // Predicated region
    $region14: #{tpu_custom_call.1} parent=1 // pred_check
      _
    $region15: #{tpu_custom_call.1} parent=1 // pred_check_branch
      %51 = sbr.rel (0) target = $region17
    $region16: #{tpu_custom_call.1} parent=1 // pred_region
      %53 = dma.done [#allocation3], 512
    $region17: #{tpu_custom_call.1} parent=1 // pred_fallthru
      _
    // Predicated region
    $region18: #{tpu_custom_call.1} parent=1 // pred_check
      _
    $region19: #{tpu_custom_call.1} parent=1 // pred_check_branch
      %55 = sbr.rel (0) target = $region21
    $region20: #{tpu_custom_call.1} parent=1 // pred_region
      %57 = dma.done [#allocation7], 512
    $region21: #{tpu_custom_call.1} parent=1 // pred_fallthru
      _
    // Predicated region
    $region22: #{tpu_custom_call.1} parent=1 // pred_check
      _
    $region23: #{tpu_custom_call.1} parent=1 // pred_check_branch
      %59 = sbr.rel (0) target = $region25
    $region24: #{tpu_custom_call.1} parent=1 // pred_region
      %61 = dma.done [#allocation5], 16
    $region25: #{tpu_custom_call.1} parent=1 // pred_fallthru
      _
    %62 = sfence
    %v63 = vld [vmem:[#allocation2] sm:$0xff]
    %v64 = vld [vmem:[#allocation2 + $0x8] sm:$0xff]
    %v65 = vld [vmem:[#allocation2 + $0x10] sm:$0xff]
    %v66 = vld [vmem:[#allocation2 + $0x18] sm:$0xff]
    %v67 = vld [vmem:[#allocation6] sm:$0xff]
    %v68 = vld [vmem:[#allocation6 + $0x8] sm:$0xff]
    %v69 = vld [vmem:[#allocation6 + $0x10] sm:$0xff]
    %v70 = vld [vmem:[#allocation6 + $0x18] sm:$0xff]
    %s71 = sld [smem:[#allocation8 + $0x32]]
    %76 = vrot.lane.b32.xlu0 %v63, 2
    %v77 = vpop.permute.xlu0 %76
    %78 = vrot.lane.b32.xlu0 %v64, 2
    %v79 = vpop.permute.xlu0 %78
    %80 = vrot.lane.b32.xlu0 %v65, 2
    %v81 = vpop.permute.xlu0 %80
    %82 = vrot.lane.b32.xlu0 %v66, 2
    %v83 = vpop.permute.xlu0 %82
    %vm88 = vcmask 15360
    %v89 = vsel %vm88, 0.0, %v77
    %v90 = vsel %vm88, 0.0, %v79
    %v91 = vsel %vm88, 0.0, %v81
    %v92 = vsel %vm88, 0.0, %v83
    %vm93 = vcmask 146432
    %v94 = vsel %vm93, %v89, 0.0
    %v95 = vsel %vm93, %v90, 0.0
    %v96 = vsel %vm93, %v91, 0.0
    %v97 = vsel %vm93, %v92, 0.0
    %vm102 = vcmask 1041408
    %v103 = vrot.slane %v94, 6
    %v104 = vrot.slane %v95, 6
    %v105 = vsel %vm102, %v103, %v104
    %v106 = vrot.slane %v96, 6
    %v107 = vrot.slane %v97, 6
    %v108 = vsel %vm102, %v106, %v107
    %v115 = vsel %vm102, 0.0, %v103
    %v116 = vsel %vm102, 0.0, %v106
    %v117 = vsel %vm102, %v104, 0.0
    %v118 = vsel %vm102, %v107, 0.0
    %v119 = vstv %s71
    %s120 = sld [smem:[#allocation8]]
    %v121 = vstv %s120
    %v122 = vmul.f32 %v115, %v121
    %v123 = vmul.f32 %v105, %v121
    %v124 = vmul.f32 %v116, %v121
    %v125 = vmul.f32 %v108, %v121
    %v126 = vadd.f32 %v119, %v122
    %v127 = vadd.f32 %v119, %v123
    %v128 = vadd.f32 %v119, %v124
    %v129 = vadd.f32 %v119, %v125
    %s130 = sld [smem:[#allocation8 + $0x5]]
    %v131 = vstv %s130
    %v132 = vmul.f32 %v115, %v131
    %v133 = vmul.f32 %v105, %v131
    %v134 = vmul.f32 %v117, %v131
    %v135 = vmul.f32 %v116, %v131
    %v136 = vmul.f32 %v108, %v131
    %v137 = vmul.f32 %v118, %v131
    %vm144 = vcmask 1046528
    %v145 = vrot.slane %v132, 1
    %v146 = vrot.slane %v133, 1
    %v147 = vsel %vm144, %v145, %v146
    %v148 = vrot.slane %v134, 1
    %v149 = vsel %vm144, %v146, %v148
    %v150 = vrot.slane %v135, 1
    %v151 = vrot.slane %v136, 1
    %v152 = vsel %vm144, %v150, %v151
    %v153 = vrot.slane %v137, 1
    %v154 = vsel %vm144, %v151, %v153
    %v159 = vadd.f32 %v126, %v147
    %v160 = vadd.f32 %v127, %v149
    %v161 = vadd.f32 %v128, %v152
    %v162 = vadd.f32 %v129, %v154
    %s163 = sld [smem:[#allocation8 + $0xa]]
    %v164 = vstv %s163
    %v165 = vmul.f32 %v115, %v164
    %v166 = vmul.f32 %v105, %v164
    %v167 = vmul.f32 %v117, %v164
    %v168 = vmul.f32 %v116, %v164
    %v169 = vmul.f32 %v108, %v164
    %v170 = vmul.f32 %v118, %v164
    %vm177 = vcmask 1045504
    %v178 = vrot.slane %v165, 2
    %v179 = vrot.slane %v166, 2
    %v180 = vsel %vm177, %v178, %v179
    %v181 = vrot.slane %v167, 2
    %v182 = vsel %vm177, %v179, %v181
    %v183 = vrot.slane %v168, 2
    %v184 = vrot.slane %v169, 2
    %v185 = vsel %vm177, %v183, %v184
    %v186 = vrot.slane %v170, 2
    %v187 = vsel %vm177, %v184, %v186
    %v192 = vadd.f32 %v159, %v180
    %v193 = vadd.f32 %v160, %v182
    %v194 = vadd.f32 %v161, %v185
    %v195 = vadd.f32 %v162, %v187
    %s196 = sld [smem:[#allocation8 + $0xf]]
    %v197 = vstv %s196
    %v198 = vmul.f32 %v115, %v197
    %v199 = vmul.f32 %v105, %v197
    %v200 = vmul.f32 %v117, %v197
    %v201 = vmul.f32 %v116, %v197
    %v202 = vmul.f32 %v108, %v197
    %v203 = vmul.f32 %v118, %v197
    %vm210 = vcmask 1044480
    %v211 = vrot.slane %v198, 3
    %v212 = vrot.slane %v199, 3
    %v213 = vsel %vm210, %v211, %v212
    %v214 = vrot.slane %v200, 3
    %v215 = vsel %vm210, %v212, %v214
    %v216 = vrot.slane %v201, 3
    %v217 = vrot.slane %v202, 3
    %v218 = vsel %vm210, %v216, %v217
    %v219 = vrot.slane %v203, 3
    %v220 = vsel %vm210, %v217, %v219
    %v225 = vadd.f32 %v192, %v213
    %v226 = vadd.f32 %v193, %v215
    %v227 = vadd.f32 %v194, %v218
    %v228 = vadd.f32 %v195, %v220
    %s229 = sld [smem:[#allocation8 + $0x14]]
    %v230 = vstv %s229
    %v231 = vmul.f32 %v115, %v230
    %v232 = vmul.f32 %v105, %v230
    %v233 = vmul.f32 %v117, %v230
    %v234 = vmul.f32 %v116, %v230
    %v235 = vmul.f32 %v108, %v230
    %v236 = vmul.f32 %v118, %v230
    %vm243 = vcmask 1043456
    %v244 = vrot.slane %v231, 4
    %v245 = vrot.slane %v232, 4
    %v246 = vsel %vm243, %v244, %v245
    %v247 = vrot.slane %v233, 4
    %v248 = vsel %vm243, %v245, %v247
    %v249 = vrot.slane %v234, 4
    %v250 = vrot.slane %v235, 4
    %v251 = vsel %vm243, %v249, %v250
    %v252 = vrot.slane %v236, 4
    %v253 = vsel %vm243, %v250, %v252
    %v258 = vadd.f32 %v225, %v246
    %v259 = vadd.f32 %v226, %v248
    %v260 = vadd.f32 %v227, %v251
    %v261 = vadd.f32 %v228, %v253
    %s262 = sld [smem:[#allocation8 + $0x1]]
    %v263 = vstv %s262
    %v264 = vmul.f32 %v115, %v263
    %v265 = vmul.f32 %v105, %v263
    %v266 = vmul.f32 %v116, %v263
    %v267 = vmul.f32 %v108, %v263
    %272 = vrot.lane.b32.xlu0 %v264, 127
    %v273 = vpop.permute.xlu0 %272
    %274 = vrot.lane.b32.xlu0 %v265, 127
    %v275 = vpop.permute.xlu0 %274
    %276 = vrot.lane.b32.xlu0 %v266, 127
    %v277 = vpop.permute.xlu0 %276
    %278 = vrot.lane.b32.xlu0 %v267, 127
    %v279 = vpop.permute.xlu0 %278
    %v284 = vadd.f32 %v258, %v273
    %v285 = vadd.f32 %v259, %v275
    %v286 = vadd.f32 %v260, %v277
    %v287 = vadd.f32 %v261, %v279
    %s288 = sld [smem:[#allocation8 + $0x6]]
    %v289 = vstv %s288
    %v290 = vmul.f32 %v115, %v289
    %v291 = vmul.f32 %v105, %v289
    %v292 = vmul.f32 %v117, %v289
    %v293 = vmul.f32 %v116, %v289
    %v294 = vmul.f32 %v108, %v289
    %v295 = vmul.f32 %v118, %v289
    %v302 = vrot.slane %v290, 1
    %v303 = vrot.slane %v291, 1
    %v304 = vsel %vm144, %v302, %v303
    %v305 = vrot.slane %v292, 1
    %v306 = vsel %vm144, %v303, %v305
    %v307 = vrot.slane %v293, 1
    %v308 = vrot.slane %v294, 1
    %v309 = vsel %vm144, %v307, %v308
    %v310 = vrot.slane %v295, 1
    %v311 = vsel %vm144, %v308, %v310
    %312 = vrot.lane.b32.xlu0 %v304, 127
    %v313 = vpop.permute.xlu0 %312
    %314 = vrot.lane.b32.xlu0 %v306, 127
    %v315 = vpop.permute.xlu0 %314
    %316 = vrot.lane.b32.xlu0 %v309, 127
    %v317 = vpop.permute.xlu0 %316
    %318 = vrot.lane.b32.xlu0 %v311, 127
    %v319 = vpop.permute.xlu0 %318
    %v324 = vadd.f32 %v284, %v313
    %v325 = vadd.f32 %v285, %v315
    %v326 = vadd.f32 %v286, %v317
    %v327 = vadd.f32 %v287, %v319
    %s328 = sld [smem:[#allocation8 + $0xb]]
    %v329 = vstv %s328
    %v330 = vmul.f32 %v115, %v329
    %v331 = vmul.f32 %v105, %v329
    %v332 = vmul.f32 %v117, %v329
    %v333 = vmul.f32 %v116, %v329
    %v334 = vmul.f32 %v108, %v329
    %v335 = vmul.f32 %v118, %v329
    %v342 = vrot.slane %v330, 2
    %v343 = vrot.slane %v331, 2
    %v344 = vsel %vm177, %v342, %v343
    %v345 = vrot.slane %v332, 2
    %v346 = vsel %vm177, %v343, %v345
    %v347 = vrot.slane %v333, 2
    %v348 = vrot.slane %v334, 2
    %v349 = vsel %vm177, %v347, %v348
    %v350 = vrot.slane %v335, 2
    %v351 = vsel %vm177, %v348, %v350
    %352 = vrot.lane.b32.xlu0 %v344, 127
    %v353 = vpop.permute.xlu0 %352
    %354 = vrot.lane.b32.xlu0 %v346, 127
    %v355 = vpop.permute.xlu0 %354
    %356 = vrot.lane.b32.xlu0 %v349, 127
    %v357 = vpop.permute.xlu0 %356
    %358 = vrot.lane.b32.xlu0 %v351, 127
    %v359 = vpop.permute.xlu0 %358
    %v364 = vadd.f32 %v324, %v353
    %v365 = vadd.f32 %v325, %v355
    %v366 = vadd.f32 %v326, %v357
    %v367 = vadd.f32 %v327, %v359
    %s368 = sld [smem:[#allocation8 + $0x10]]
    %v369 = vstv %s368
    %v370 = vmul.f32 %v115, %v369
    %v371 = vmul.f32 %v105, %v369
    %v372 = vmul.f32 %v117, %v369
    %v373 = vmul.f32 %v116, %v369
    %v374 = vmul.f32 %v108, %v369
    %v375 = vmul.f32 %v118, %v369
    %v382 = vrot.slane %v370, 3
    %v383 = vrot.slane %v371, 3
    %v384 = vsel %vm210, %v382, %v383
    %v385 = vrot.slane %v372, 3
    %v386 = vsel %vm210, %v383, %v385
    %v387 = vrot.slane %v373, 3
    %v388 = vrot.slane %v374, 3
    %v389 = vsel %vm210, %v387, %v388
    %v390 = vrot.slane %v375, 3
    %v391 = vsel %vm210, %v388, %v390
    %392 = vrot.lane.b32.xlu0 %v384, 127
    %v393 = vpop.permute.xlu0 %392
    %394 = vrot.lane.b32.xlu0 %v386, 127
    %v395 = vpop.permute.xlu0 %394
    %396 = vrot.lane.b32.xlu0 %v389, 127
    %v397 = vpop.permute.xlu0 %396
    %398 = vrot.lane.b32.xlu0 %v391, 127
    %v399 = vpop.permute.xlu0 %398
    %v404 = vadd.f32 %v364, %v393
    %v405 = vadd.f32 %v365, %v395
    %v406 = vadd.f32 %v366, %v397
    %v407 = vadd.f32 %v367, %v399
    %s408 = sld [smem:[#allocation8 + $0x15]]
    %v409 = vstv %s408
    %v410 = vmul.f32 %v115, %v409
    %v411 = vmul.f32 %v105, %v409
    %v412 = vmul.f32 %v117, %v409
    %v413 = vmul.f32 %v116, %v409
    %v414 = vmul.f32 %v108, %v409
    %v415 = vmul.f32 %v118, %v409
    %v422 = vrot.slane %v410, 4
    %v423 = vrot.slane %v411, 4
    %v424 = vsel %vm243, %v422, %v423
    %v425 = vrot.slane %v412, 4
    %v426 = vsel %vm243, %v423, %v425
    %v427 = vrot.slane %v413, 4
    %v428 = vrot.slane %v414, 4
    %v429 = vsel %vm243, %v427, %v428
    %v430 = vrot.slane %v415, 4
    %v431 = vsel %vm243, %v428, %v430
    %432 = vrot.lane.b32.xlu0 %v424, 127
    %v433 = vpop.permute.xlu0 %432
    %434 = vrot.lane.b32.xlu0 %v426, 127
    %v435 = vpop.permute.xlu0 %434
    %436 = vrot.lane.b32.xlu0 %v429, 127
    %v437 = vpop.permute.xlu0 %436
    %438 = vrot.lane.b32.xlu0 %v431, 127
    %v439 = vpop.permute.xlu0 %438
    %v444 = vadd.f32 %v404, %v433
    %v445 = vadd.f32 %v405, %v435
    %v446 = vadd.f32 %v406, %v437
    %v447 = vadd.f32 %v407, %v439
    %s448 = sld [smem:[#allocation8 + $0x2]]
    %v449 = vstv %s448
    %v450 = vmul.f32 %v115, %v449
    %v451 = vmul.f32 %v105, %v449
    %v452 = vmul.f32 %v116, %v449
    %v453 = vmul.f32 %v108, %v449
    %458 = vrot.lane.b32.xlu0 %v450, 126
    %v459 = vpop.permute.xlu0 %458
    %460 = vrot.lane.b32.xlu0 %v451, 126
    %v461 = vpop.permute.xlu0 %460
    %462 = vrot.lane.b32.xlu0 %v452, 126
    %v463 = vpop.permute.xlu0 %462
    %464 = vrot.lane.b32.xlu0 %v453, 126
    %v465 = vpop.permute.xlu0 %464
    %v470 = vadd.f32 %v444, %v459
    %v471 = vadd.f32 %v445, %v461
    %v472 = vadd.f32 %v446, %v463
    %v473 = vadd.f32 %v447, %v465
    %s474 = sld [smem:[#allocation8 + $0x7]]
    %v475 = vstv %s474
    %v476 = vmul.f32 %v115, %v475
    %v477 = vmul.f32 %v105, %v475
    %v478 = vmul.f32 %v117, %v475
    %v479 = vmul.f32 %v116, %v475
    %v480 = vmul.f32 %v108, %v475
    %v481 = vmul.f32 %v118, %v475
    %v488 = vrot.slane %v476, 1
    %v489 = vrot.slane %v477, 1
    %v490 = vsel %vm144, %v488, %v489
    %v491 = vrot.slane %v478, 1
    %v492 = vsel %vm144, %v489, %v491
    %v493 = vrot.slane %v479, 1
    %v494 = vrot.slane %v480, 1
    %v495 = vsel %vm144, %v493, %v494
    %v496 = vrot.slane %v481, 1
    %v497 = vsel %vm144, %v494, %v496
    %498 = vrot.lane.b32.xlu0 %v490, 126
    %v499 = vpop.permute.xlu0 %498
    %500 = vrot.lane.b32.xlu0 %v492, 126
    %v501 = vpop.permute.xlu0 %500
    %502 = vrot.lane.b32.xlu0 %v495, 126
    %v503 = vpop.permute.xlu0 %502
    %504 = vrot.lane.b32.xlu0 %v497, 126
    %v505 = vpop.permute.xlu0 %504
    %v510 = vadd.f32 %v470, %v499
    %v511 = vadd.f32 %v471, %v501
    %v512 = vadd.f32 %v472, %v503
    %v513 = vadd.f32 %v473, %v505
    %s514 = sld [smem:[#allocation8 + $0xc]]
    %v515 = vstv %s514
    %v516 = vmul.f32 %v115, %v515
    %v517 = vmul.f32 %v105, %v515
    %v518 = vmul.f32 %v117, %v515
    %v519 = vmul.f32 %v116, %v515
    %v520 = vmul.f32 %v108, %v515
    %v521 = vmul.f32 %v118, %v515
    %v528 = vrot.slane %v516, 2
    %v529 = vrot.slane %v517, 2
    %v530 = vsel %vm177, %v528, %v529
    %v531 = vrot.slane %v518, 2
    %v532 = vsel %vm177, %v529, %v531
    %v533 = vrot.slane %v519, 2
    %v534 = vrot.slane %v520, 2
    %v535 = vsel %vm177, %v533, %v534
    %v536 = vrot.slane %v521, 2
    %v537 = vsel %vm177, %v534, %v536
    %538 = vrot.lane.b32.xlu0 %v530, 126
    %v539 = vpop.permute.xlu0 %538
    %540 = vrot.lane.b32.xlu0 %v532, 126
    %v541 = vpop.permute.xlu0 %540
    %542 = vrot.lane.b32.xlu0 %v535, 126
    %v543 = vpop.permute.xlu0 %542
    %544 = vrot.lane.b32.xlu0 %v537, 126
    %v545 = vpop.permute.xlu0 %544
    %v550 = vadd.f32 %v510, %v539
    %v551 = vadd.f32 %v511, %v541
    %v552 = vadd.f32 %v512, %v543
    %v553 = vadd.f32 %v513, %v545
    %s554 = sld [smem:[#allocation8 + $0x11]]
    %v555 = vstv %s554
    %v556 = vmul.f32 %v115, %v555
    %v557 = vmul.f32 %v105, %v555
    %v558 = vmul.f32 %v117, %v555
    %v559 = vmul.f32 %v116, %v555
    %v560 = vmul.f32 %v108, %v555
    %v561 = vmul.f32 %v118, %v555
    %v568 = vrot.slane %v556, 3
    %v569 = vrot.slane %v557, 3
    %v570 = vsel %vm210, %v568, %v569
    %v571 = vrot.slane %v558, 3
    %v572 = vsel %vm210, %v569, %v571
    %v573 = vrot.slane %v559, 3
    %v574 = vrot.slane %v560, 3
    %v575 = vsel %vm210, %v573, %v574
    %v576 = vrot.slane %v561, 3
    %v577 = vsel %vm210, %v574, %v576
    %578 = vrot.lane.b32.xlu0 %v570, 126
    %v579 = vpop.permute.xlu0 %578
    %580 = vrot.lane.b32.xlu0 %v572, 126
    %v581 = vpop.permute.xlu0 %580
    %582 = vrot.lane.b32.xlu0 %v575, 126
    %v583 = vpop.permute.xlu0 %582
    %584 = vrot.lane.b32.xlu0 %v577, 126
    %v585 = vpop.permute.xlu0 %584
    %v590 = vadd.f32 %v550, %v579
    %v591 = vadd.f32 %v551, %v581
    %v592 = vadd.f32 %v552, %v583
    %v593 = vadd.f32 %v553, %v585
    %s594 = sld [smem:[#allocation8 + $0x16]]
    %v595 = vstv %s594
    %v596 = vmul.f32 %v115, %v595
    %v597 = vmul.f32 %v105, %v595
    %v598 = vmul.f32 %v117, %v595
    %v599 = vmul.f32 %v116, %v595
    %v600 = vmul.f32 %v108, %v595
    %v601 = vmul.f32 %v118, %v595
    %v608 = vrot.slane %v596, 4
    %v609 = vrot.slane %v597, 4
    %v610 = vsel %vm243, %v608, %v609
    %v611 = vrot.slane %v598, 4
    %v612 = vsel %vm243, %v609, %v611
    %v613 = vrot.slane %v599, 4
    %v614 = vrot.slane %v600, 4
    %v615 = vsel %vm243, %v613, %v614
    %v616 = vrot.slane %v601, 4
    %v617 = vsel %vm243, %v614, %v616
    %618 = vrot.lane.b32.xlu0 %v610, 126
    %v619 = vpop.permute.xlu0 %618
    %620 = vrot.lane.b32.xlu0 %v612, 126
    %v621 = vpop.permute.xlu0 %620
    %622 = vrot.lane.b32.xlu0 %v615, 126
    %v623 = vpop.permute.xlu0 %622
    %624 = vrot.lane.b32.xlu0 %v617, 126
    %v625 = vpop.permute.xlu0 %624
    %v630 = vadd.f32 %v590, %v619
    %v631 = vadd.f32 %v591, %v621
    %v632 = vadd.f32 %v592, %v623
    %v633 = vadd.f32 %v593, %v625
    %s634 = sld [smem:[#allocation8 + $0x3]]
    %v635 = vstv %s634
    %v636 = vmul.f32 %v115, %v635
    %v637 = vmul.f32 %v105, %v635
    %v638 = vmul.f32 %v116, %v635
    %v639 = vmul.f32 %v108, %v635
    %644 = vrot.lane.b32.xlu0 %v636, 125
    %v645 = vpop.permute.xlu0 %644
    %646 = vrot.lane.b32.xlu0 %v637, 125
    %v647 = vpop.permute.xlu0 %646
    %648 = vrot.lane.b32.xlu0 %v638, 125
    %v649 = vpop.permute.xlu0 %648
    %650 = vrot.lane.b32.xlu0 %v639, 125
    %v651 = vpop.permute.xlu0 %650
    %v656 = vadd.f32 %v630, %v645
    %v657 = vadd.f32 %v631, %v647
    %v658 = vadd.f32 %v632, %v649
    %v659 = vadd.f32 %v633, %v651
    %s660 = sld [smem:[#allocation8 + $0x8]]
    %v661 = vstv %s660
    %v662 = vmul.f32 %v115, %v661
    %v663 = vmul.f32 %v105, %v661
    %v664 = vmul.f32 %v117, %v661
    %v665 = vmul.f32 %v116, %v661
    %v666 = vmul.f32 %v108, %v661
    %v667 = vmul.f32 %v118, %v661
    %v674 = vrot.slane %v662, 1
    %v675 = vrot.slane %v663, 1
    %v676 = vsel %vm144, %v674, %v675
    %v677 = vrot.slane %v664, 1
    %v678 = vsel %vm144, %v675, %v677
    %v679 = vrot.slane %v665, 1
    %v680 = vrot.slane %v666, 1
    %v681 = vsel %vm144, %v679, %v680
    %v682 = vrot.slane %v667, 1
    %v683 = vsel %vm144, %v680, %v682
    %684 = vrot.lane.b32.xlu0 %v676, 125
    %v685 = vpop.permute.xlu0 %684
    %686 = vrot.lane.b32.xlu0 %v678, 125
    %v687 = vpop.permute.xlu0 %686
    %688 = vrot.lane.b32.xlu0 %v681, 125
    %v689 = vpop.permute.xlu0 %688
    %690 = vrot.lane.b32.xlu0 %v683, 125
    %v691 = vpop.permute.xlu0 %690
    %v696 = vadd.f32 %v656, %v685
    %v697 = vadd.f32 %v657, %v687
    %v698 = vadd.f32 %v658, %v689
    %v699 = vadd.f32 %v659, %v691
    %s700 = sld [smem:[#allocation8 + $0xd]]
    %v701 = vstv %s700
    %v702 = vmul.f32 %v115, %v701
    %v703 = vmul.f32 %v105, %v701
    %v704 = vmul.f32 %v117, %v701
    %v705 = vmul.f32 %v116, %v701
    %v706 = vmul.f32 %v108, %v701
    %v707 = vmul.f32 %v118, %v701
    %v714 = vrot.slane %v702, 2
    %v715 = vrot.slane %v703, 2
    %v716 = vsel %vm177, %v714, %v715
    %v717 = vrot.slane %v704, 2
    %v718 = vsel %vm177, %v715, %v717
    %v719 = vrot.slane %v705, 2
    %v720 = vrot.slane %v706, 2
    %v721 = vsel %vm177, %v719, %v720
    %v722 = vrot.slane %v707, 2
    %v723 = vsel %vm177, %v720, %v722
    %724 = vrot.lane.b32.xlu0 %v716, 125
    %v725 = vpop.permute.xlu0 %724
    %726 = vrot.lane.b32.xlu0 %v718, 125
    %v727 = vpop.permute.xlu0 %726
    %728 = vrot.lane.b32.xlu0 %v721, 125
    %v729 = vpop.permute.xlu0 %728
    %730 = vrot.lane.b32.xlu0 %v723, 125
    %v731 = vpop.permute.xlu0 %730
    %v736 = vadd.f32 %v696, %v725
    %v737 = vadd.f32 %v697, %v727
    %v738 = vadd.f32 %v698, %v729
    %v739 = vadd.f32 %v699, %v731
    %s740 = sld [smem:[#allocation8 + $0x12]]
    %v741 = vstv %s740
    %v742 = vmul.f32 %v115, %v741
    %v743 = vmul.f32 %v105, %v741
    %v744 = vmul.f32 %v117, %v741
    %v745 = vmul.f32 %v116, %v741
    %v746 = vmul.f32 %v108, %v741
    %v747 = vmul.f32 %v118, %v741
    %v754 = vrot.slane %v742, 3
    %v755 = vrot.slane %v743, 3
    %v756 = vsel %vm210, %v754, %v755
    %v757 = vrot.slane %v744, 3
    %v758 = vsel %vm210, %v755, %v757
    %v759 = vrot.slane %v745, 3
    %v760 = vrot.slane %v746, 3
    %v761 = vsel %vm210, %v759, %v760
    %v762 = vrot.slane %v747, 3
    %v763 = vsel %vm210, %v760, %v762
    %764 = vrot.lane.b32.xlu0 %v756, 125
    %v765 = vpop.permute.xlu0 %764
    %766 = vrot.lane.b32.xlu0 %v758, 125
    %v767 = vpop.permute.xlu0 %766
    %768 = vrot.lane.b32.xlu0 %v761, 125
    %v769 = vpop.permute.xlu0 %768
    %770 = vrot.lane.b32.xlu0 %v763, 125
    %v771 = vpop.permute.xlu0 %770
    %v776 = vadd.f32 %v736, %v765
    %v777 = vadd.f32 %v737, %v767
    %v778 = vadd.f32 %v738, %v769
    %v779 = vadd.f32 %v739, %v771
    %s780 = sld [smem:[#allocation8 + $0x17]]
    %v781 = vstv %s780
    %v782 = vmul.f32 %v115, %v781
    %v783 = vmul.f32 %v105, %v781
    %v784 = vmul.f32 %v117, %v781
    %v785 = vmul.f32 %v116, %v781
    %v786 = vmul.f32 %v108, %v781
    %v787 = vmul.f32 %v118, %v781
    %v794 = vrot.slane %v782, 4
    %v795 = vrot.slane %v783, 4
    %v796 = vsel %vm243, %v794, %v795
    %v797 = vrot.slane %v784, 4
    %v798 = vsel %vm243, %v795, %v797
    %v799 = vrot.slane %v785, 4
    %v800 = vrot.slane %v786, 4
    %v801 = vsel %vm243, %v799, %v800
    %v802 = vrot.slane %v787, 4
    %v803 = vsel %vm243, %v800, %v802
    %804 = vrot.lane.b32.xlu0 %v796, 125
    %v805 = vpop.permute.xlu0 %804
    %806 = vrot.lane.b32.xlu0 %v798, 125
    %v807 = vpop.permute.xlu0 %806
    %808 = vrot.lane.b32.xlu0 %v801, 125
    %v809 = vpop.permute.xlu0 %808
    %810 = vrot.lane.b32.xlu0 %v803, 125
    %v811 = vpop.permute.xlu0 %810
    %v816 = vadd.f32 %v776, %v805
    %v817 = vadd.f32 %v777, %v807
    %v818 = vadd.f32 %v778, %v809
    %v819 = vadd.f32 %v779, %v811
    %s820 = sld [smem:[#allocation8 + $0x4]]
    %v821 = vstv %s820
    %v822 = vmul.f32 %v115, %v821
    %v823 = vmul.f32 %v105, %v821
    %v824 = vmul.f32 %v116, %v821
    %v825 = vmul.f32 %v108, %v821
    %830 = vrot.lane.b32.xlu0 %v822, 124
    %v831 = vpop.permute.xlu0 %830
    %832 = vrot.lane.b32.xlu0 %v823, 124
    %v833 = vpop.permute.xlu0 %832
    %834 = vrot.lane.b32.xlu0 %v824, 124
    %v835 = vpop.permute.xlu0 %834
    %836 = vrot.lane.b32.xlu0 %v825, 124
    %v837 = vpop.permute.xlu0 %836
    %v842 = vadd.f32 %v816, %v831
    %v843 = vadd.f32 %v817, %v833
    %v844 = vadd.f32 %v818, %v835
    %v845 = vadd.f32 %v819, %v837
    %s846 = sld [smem:[#allocation8 + $0x9]]
    %v847 = vstv %s846
    %v848 = vmul.f32 %v115, %v847
    %v849 = vmul.f32 %v105, %v847
    %v850 = vmul.f32 %v117, %v847
    %v851 = vmul.f32 %v116, %v847
    %v852 = vmul.f32 %v108, %v847
    %v853 = vmul.f32 %v118, %v847
    %v860 = vrot.slane %v848, 1
    %v861 = vrot.slane %v849, 1
    %v862 = vsel %vm144, %v860, %v861
    %v863 = vrot.slane %v850, 1
    %v864 = vsel %vm144, %v861, %v863
    %v865 = vrot.slane %v851, 1
    %v866 = vrot.slane %v852, 1
    %v867 = vsel %vm144, %v865, %v866
    %v868 = vrot.slane %v853, 1
    %v869 = vsel %vm144, %v866, %v868
    %870 = vrot.lane.b32.xlu0 %v862, 124
    %v871 = vpop.permute.xlu0 %870
    %872 = vrot.lane.b32.xlu0 %v864, 124
    %v873 = vpop.permute.xlu0 %872
    %874 = vrot.lane.b32.xlu0 %v867, 124
    %v875 = vpop.permute.xlu0 %874
    %876 = vrot.lane.b32.xlu0 %v869, 124
    %v877 = vpop.permute.xlu0 %876
    %v882 = vadd.f32 %v842, %v871
    %v883 = vadd.f32 %v843, %v873
    %v884 = vadd.f32 %v844, %v875
    %v885 = vadd.f32 %v845, %v877
    %s886 = sld [smem:[#allocation8 + $0xe]]
    %v887 = vstv %s886
    %v888 = vmul.f32 %v115, %v887
    %v889 = vmul.f32 %v105, %v887
    %v890 = vmul.f32 %v117, %v887
    %v891 = vmul.f32 %v116, %v887
    %v892 = vmul.f32 %v108, %v887
    %v893 = vmul.f32 %v118, %v887
    %v900 = vrot.slane %v888, 2
    %v901 = vrot.slane %v889, 2
    %v902 = vsel %vm177, %v900, %v901
    %v903 = vrot.slane %v890, 2
    %v904 = vsel %vm177, %v901, %v903
    %v905 = vrot.slane %v891, 2
    %v906 = vrot.slane %v892, 2
    %v907 = vsel %vm177, %v905, %v906
    %v908 = vrot.slane %v893, 2
    %v909 = vsel %vm177, %v906, %v908
    %910 = vrot.lane.b32.xlu0 %v902, 124
    %v911 = vpop.permute.xlu0 %910
    %912 = vrot.lane.b32.xlu0 %v904, 124
    %v913 = vpop.permute.xlu0 %912
    %914 = vrot.lane.b32.xlu0 %v907, 124
    %v915 = vpop.permute.xlu0 %914
    %916 = vrot.lane.b32.xlu0 %v909, 124
    %v917 = vpop.permute.xlu0 %916
    %v922 = vadd.f32 %v882, %v911
    %v923 = vadd.f32 %v883, %v913
    %v924 = vadd.f32 %v884, %v915
    %v925 = vadd.f32 %v885, %v917
    %s926 = sld [smem:[#allocation8 + $0x13]]
    %v927 = vstv %s926
    %v928 = vmul.f32 %v115, %v927
    %v929 = vmul.f32 %v105, %v927
    %v930 = vmul.f32 %v117, %v927
    %v931 = vmul.f32 %v116, %v927
    %v932 = vmul.f32 %v108, %v927
    %v933 = vmul.f32 %v118, %v927
    %v940 = vrot.slane %v928, 3
    %v941 = vrot.slane %v929, 3
    %v942 = vsel %vm210, %v940, %v941
    %v943 = vrot.slane %v930, 3
    %v944 = vsel %vm210, %v941, %v943
    %v945 = vrot.slane %v931, 3
    %v946 = vrot.slane %v932, 3
    %v947 = vsel %vm210, %v945, %v946
    %v948 = vrot.slane %v933, 3
    %v949 = vsel %vm210, %v946, %v948
    %950 = vrot.lane.b32.xlu0 %v942, 124
    %v951 = vpop.permute.xlu0 %950
    %952 = vrot.lane.b32.xlu0 %v944, 124
    %v953 = vpop.permute.xlu0 %952
    %954 = vrot.lane.b32.xlu0 %v947, 124
    %v955 = vpop.permute.xlu0 %954
    %956 = vrot.lane.b32.xlu0 %v949, 124
    %v957 = vpop.permute.xlu0 %956
    %v962 = vadd.f32 %v922, %v951
    %v963 = vadd.f32 %v923, %v953
    %v964 = vadd.f32 %v924, %v955
    %v965 = vadd.f32 %v925, %v957
    %s966 = sld [smem:[#allocation8 + $0x18]]
    %v967 = vstv %s966
    %v968 = vmul.f32 %v115, %v967
    %v969 = vmul.f32 %v105, %v967
    %v970 = vmul.f32 %v117, %v967
    %v971 = vmul.f32 %v116, %v967
    %v972 = vmul.f32 %v108, %v967
    %v973 = vmul.f32 %v118, %v967
    %v980 = vrot.slane %v968, 4
    %v981 = vrot.slane %v969, 4
    %v982 = vsel %vm243, %v980, %v981
    %v983 = vrot.slane %v970, 4
    %v984 = vsel %vm243, %v981, %v983
    %v985 = vrot.slane %v971, 4
    %v986 = vrot.slane %v972, 4
    %v987 = vsel %vm243, %v985, %v986
    %v988 = vrot.slane %v973, 4
    %v989 = vsel %vm243, %v986, %v988
    %990 = vrot.lane.b32.xlu0 %v982, 124
    %v991 = vpop.permute.xlu0 %990
    %992 = vrot.lane.b32.xlu0 %v984, 124
    %v993 = vpop.permute.xlu0 %992
    %994 = vrot.lane.b32.xlu0 %v987, 124
    %v995 = vpop.permute.xlu0 %994
    %996 = vrot.lane.b32.xlu0 %v989, 124
    %v997 = vpop.permute.xlu0 %996
    %v1002 = vadd.f32 %v962, %v991
    %v1003 = vadd.f32 %v963, %v993
    %v1004 = vadd.f32 %v964, %v995
    %v1005 = vadd.f32 %v965, %v997
    %s1006 = sld [smem:[#allocation8 + $0x33]]
    %1011 = vrot.lane.b32.xlu0 %v67, 2
    %v1012 = vpop.permute.xlu0 %1011
    %1013 = vrot.lane.b32.xlu0 %v68, 2
    %v1014 = vpop.permute.xlu0 %1013
    %1015 = vrot.lane.b32.xlu0 %v69, 2
    %v1016 = vpop.permute.xlu0 %1015
    %1017 = vrot.lane.b32.xlu0 %v70, 2
    %v1018 = vpop.permute.xlu0 %1017
    %v1023 = vsel %vm88, 0.0, %v1012
    %v1024 = vsel %vm88, 0.0, %v1014
    %v1025 = vsel %vm88, 0.0, %v1016
    %v1026 = vsel %vm88, 0.0, %v1018
    %v1027 = vsel %vm93, %v1023, 0.0
    %v1028 = vsel %vm93, %v1024, 0.0
    %v1029 = vsel %vm93, %v1025, 0.0
    %v1030 = vsel %vm93, %v1026, 0.0
    %v1035 = vrot.slane %v1027, 6
    %v1036 = vrot.slane %v1028, 6
    %v1037 = vsel %vm102, %v1035, %v1036
    %v1038 = vrot.slane %v1029, 6
    %v1039 = vrot.slane %v1030, 6
    %v1040 = vsel %vm102, %v1038, %v1039
    %v1047 = vsel %vm102, 0.0, %v1035
    %v1048 = vsel %vm102, 0.0, %v1038
    %v1049 = vsel %vm102, %v1036, 0.0
    %v1050 = vsel %vm102, %v1039, 0.0
    %v1051 = vstv %s1006
    %s1052 = sld [smem:[#allocation8 + $0x19]]
    %v1053 = vstv %s1052
    %v1054 = vmul.f32 %v1047, %v1053
    %v1055 = vmul.f32 %v1037, %v1053
    %v1056 = vmul.f32 %v1048, %v1053
    %v1057 = vmul.f32 %v1040, %v1053
    %v1058 = vadd.f32 %v1051, %v1054
    %v1059 = vadd.f32 %v1051, %v1055
    %v1060 = vadd.f32 %v1051, %v1056
    %v1061 = vadd.f32 %v1051, %v1057
    %s1062 = sld [smem:[#allocation8 + $0x1e]]
    %v1063 = vstv %s1062
    %v1064 = vmul.f32 %v1047, %v1063
    %v1065 = vmul.f32 %v1037, %v1063
    %v1066 = vmul.f32 %v1049, %v1063
    %v1067 = vmul.f32 %v1048, %v1063
    %v1068 = vmul.f32 %v1040, %v1063
    %v1069 = vmul.f32 %v1050, %v1063
    %v1076 = vrot.slane %v1064, 1
    %v1077 = vrot.slane %v1065, 1
    %v1078 = vsel %vm144, %v1076, %v1077
    %v1079 = vrot.slane %v1066, 1
    %v1080 = vsel %vm144, %v1077, %v1079
    %v1081 = vrot.slane %v1067, 1
    %v1082 = vrot.slane %v1068, 1
    %v1083 = vsel %vm144, %v1081, %v1082
    %v1084 = vrot.slane %v1069, 1
    %v1085 = vsel %vm144, %v1082, %v1084
    %v1090 = vadd.f32 %v1058, %v1078
    %v1091 = vadd.f32 %v1059, %v1080
    %v1092 = vadd.f32 %v1060, %v1083
    %v1093 = vadd.f32 %v1061, %v1085
    %s1094 = sld [smem:[#allocation8 + $0x23]]
    %v1095 = vstv %s1094
    %v1096 = vmul.f32 %v1047, %v1095
    %v1097 = vmul.f32 %v1037, %v1095
    %v1098 = vmul.f32 %v1049, %v1095
    %v1099 = vmul.f32 %v1048, %v1095
    %v1100 = vmul.f32 %v1040, %v1095
    %v1101 = vmul.f32 %v1050, %v1095
    %v1108 = vrot.slane %v1096, 2
    %v1109 = vrot.slane %v1097, 2
    %v1110 = vsel %vm177, %v1108, %v1109
    %v1111 = vrot.slane %v1098, 2
    %v1112 = vsel %vm177, %v1109, %v1111
    %v1113 = vrot.slane %v1099, 2
    %v1114 = vrot.slane %v1100, 2
    %v1115 = vsel %vm177, %v1113, %v1114
    %v1116 = vrot.slane %v1101, 2
    %v1117 = vsel %vm177, %v1114, %v1116
    %v1122 = vadd.f32 %v1090, %v1110
    %v1123 = vadd.f32 %v1091, %v1112
    %v1124 = vadd.f32 %v1092, %v1115
    %v1125 = vadd.f32 %v1093, %v1117
    %s1126 = sld [smem:[#allocation8 + $0x28]]
    %v1127 = vstv %s1126
    %v1128 = vmul.f32 %v1047, %v1127
    %v1129 = vmul.f32 %v1037, %v1127
    %v1130 = vmul.f32 %v1049, %v1127
    %v1131 = vmul.f32 %v1048, %v1127
    %v1132 = vmul.f32 %v1040, %v1127
    %v1133 = vmul.f32 %v1050, %v1127
    %v1140 = vrot.slane %v1128, 3
    %v1141 = vrot.slane %v1129, 3
    %v1142 = vsel %vm210, %v1140, %v1141
    %v1143 = vrot.slane %v1130, 3
    %v1144 = vsel %vm210, %v1141, %v1143
    %v1145 = vrot.slane %v1131, 3
    %v1146 = vrot.slane %v1132, 3
    %v1147 = vsel %vm210, %v1145, %v1146
    %v1148 = vrot.slane %v1133, 3
    %v1149 = vsel %vm210, %v1146, %v1148
    %v1154 = vadd.f32 %v1122, %v1142
    %v1155 = vadd.f32 %v1123, %v1144
    %v1156 = vadd.f32 %v1124, %v1147
    %v1157 = vadd.f32 %v1125, %v1149
    %s1158 = sld [smem:[#allocation8 + $0x2d]]
    %v1159 = vstv %s1158
    %v1160 = vmul.f32 %v1047, %v1159
    %v1161 = vmul.f32 %v1037, %v1159
    %v1162 = vmul.f32 %v1049, %v1159
    %v1163 = vmul.f32 %v1048, %v1159
    %v1164 = vmul.f32 %v1040, %v1159
    %v1165 = vmul.f32 %v1050, %v1159
    %v1172 = vrot.slane %v1160, 4
    %v1173 = vrot.slane %v1161, 4
    %v1174 = vsel %vm243, %v1172, %v1173
    %v1175 = vrot.slane %v1162, 4
    %v1176 = vsel %vm243, %v1173, %v1175
    %v1177 = vrot.slane %v1163, 4
    %v1178 = vrot.slane %v1164, 4
    %v1179 = vsel %vm243, %v1177, %v1178
    %v1180 = vrot.slane %v1165, 4
    %v1181 = vsel %vm243, %v1178, %v1180
    %v1186 = vadd.f32 %v1154, %v1174
    %v1187 = vadd.f32 %v1155, %v1176
    %v1188 = vadd.f32 %v1156, %v1179
    %v1189 = vadd.f32 %v1157, %v1181
    %s1190 = sld [smem:[#allocation8 + $0x1a]]
    %v1191 = vstv %s1190
    %v1192 = vmul.f32 %v1047, %v1191
    %v1193 = vmul.f32 %v1037, %v1191
    %v1194 = vmul.f32 %v1048, %v1191
    %v1195 = vmul.f32 %v1040, %v1191
    %1200 = vrot.lane.b32.xlu0 %v1192, 127
    %v1201 = vpop.permute.xlu0 %1200
    %1202 = vrot.lane.b32.xlu0 %v1193, 127
    %v1203 = vpop.permute.xlu0 %1202
    %1204 = vrot.lane.b32.xlu0 %v1194, 127
    %v1205 = vpop.permute.xlu0 %1204
    %1206 = vrot.lane.b32.xlu0 %v1195, 127
    %v1207 = vpop.permute.xlu0 %1206
    %v1212 = vadd.f32 %v1186, %v1201
    %v1213 = vadd.f32 %v1187, %v1203
    %v1214 = vadd.f32 %v1188, %v1205
    %v1215 = vadd.f32 %v1189, %v1207
    %s1216 = sld [smem:[#allocation8 + $0x1f]]
    %v1217 = vstv %s1216
    %v1218 = vmul.f32 %v1047, %v1217
    %v1219 = vmul.f32 %v1037, %v1217
    %v1220 = vmul.f32 %v1049, %v1217
    %v1221 = vmul.f32 %v1048, %v1217
    %v1222 = vmul.f32 %v1040, %v1217
    %v1223 = vmul.f32 %v1050, %v1217
    %v1230 = vrot.slane %v1218, 1
    %v1231 = vrot.slane %v1219, 1
    %v1232 = vsel %vm144, %v1230, %v1231
    %v1233 = vrot.slane %v1220, 1
    %v1234 = vsel %vm144, %v1231, %v1233
    %v1235 = vrot.slane %v1221, 1
    %v1236 = vrot.slane %v1222, 1
    %v1237 = vsel %vm144, %v1235, %v1236
    %v1238 = vrot.slane %v1223, 1
    %v1239 = vsel %vm144, %v1236, %v1238
    %1240 = vrot.lane.b32.xlu0 %v1232, 127
    %v1241 = vpop.permute.xlu0 %1240
    %1242 = vrot.lane.b32.xlu0 %v1234, 127
    %v1243 = vpop.permute.xlu0 %1242
    %1244 = vrot.lane.b32.xlu0 %v1237, 127
    %v1245 = vpop.permute.xlu0 %1244
    %1246 = vrot.lane.b32.xlu0 %v1239, 127
    %v1247 = vpop.permute.xlu0 %1246
    %v1252 = vadd.f32 %v1212, %v1241
    %v1253 = vadd.f32 %v1213, %v1243
    %v1254 = vadd.f32 %v1214, %v1245
    %v1255 = vadd.f32 %v1215, %v1247
    %s1256 = sld [smem:[#allocation8 + $0x24]]
    %v1257 = vstv %s1256
    %v1258 = vmul.f32 %v1047, %v1257
    %v1259 = vmul.f32 %v1037, %v1257
    %v1260 = vmul.f32 %v1049, %v1257
    %v1261 = vmul.f32 %v1048, %v1257
    %v1262 = vmul.f32 %v1040, %v1257
    %v1263 = vmul.f32 %v1050, %v1257
    %v1270 = vrot.slane %v1258, 2
    %v1271 = vrot.slane %v1259, 2
    %v1272 = vsel %vm177, %v1270, %v1271
    %v1273 = vrot.slane %v1260, 2
    %v1274 = vsel %vm177, %v1271, %v1273
    %v1275 = vrot.slane %v1261, 2
    %v1276 = vrot.slane %v1262, 2
    %v1277 = vsel %vm177, %v1275, %v1276
    %v1278 = vrot.slane %v1263, 2
    %v1279 = vsel %vm177, %v1276, %v1278
    %1280 = vrot.lane.b32.xlu0 %v1272, 127
    %v1281 = vpop.permute.xlu0 %1280
    %1282 = vrot.lane.b32.xlu0 %v1274, 127
    %v1283 = vpop.permute.xlu0 %1282
    %1284 = vrot.lane.b32.xlu0 %v1277, 127
    %v1285 = vpop.permute.xlu0 %1284
    %1286 = vrot.lane.b32.xlu0 %v1279, 127
    %v1287 = vpop.permute.xlu0 %1286
    %v1292 = vadd.f32 %v1252, %v1281
    %v1293 = vadd.f32 %v1253, %v1283
    %v1294 = vadd.f32 %v1254, %v1285
    %v1295 = vadd.f32 %v1255, %v1287
    %s1296 = sld [smem:[#allocation8 + $0x29]]
    %v1297 = vstv %s1296
    %v1298 = vmul.f32 %v1047, %v1297
    %v1299 = vmul.f32 %v1037, %v1297
    %v1300 = vmul.f32 %v1049, %v1297
    %v1301 = vmul.f32 %v1048, %v1297
    %v1302 = vmul.f32 %v1040, %v1297
    %v1303 = vmul.f32 %v1050, %v1297
    %v1310 = vrot.slane %v1298, 3
    %v1311 = vrot.slane %v1299, 3
    %v1312 = vsel %vm210, %v1310, %v1311
    %v1313 = vrot.slane %v1300, 3
    %v1314 = vsel %vm210, %v1311, %v1313
    %v1315 = vrot.slane %v1301, 3
    %v1316 = vrot.slane %v1302, 3
    %v1317 = vsel %vm210, %v1315, %v1316
    %v1318 = vrot.slane %v1303, 3
    %v1319 = vsel %vm210, %v1316, %v1318
    %1320 = vrot.lane.b32.xlu0 %v1312, 127
    %v1321 = vpop.permute.xlu0 %1320
    %1322 = vrot.lane.b32.xlu0 %v1314, 127
    %v1323 = vpop.permute.xlu0 %1322
    %1324 = vrot.lane.b32.xlu0 %v1317, 127
    %v1325 = vpop.permute.xlu0 %1324
    %1326 = vrot.lane.b32.xlu0 %v1319, 127
    %v1327 = vpop.permute.xlu0 %1326
    %v1332 = vadd.f32 %v1292, %v1321
    %v1333 = vadd.f32 %v1293, %v1323
    %v1334 = vadd.f32 %v1294, %v1325
    %v1335 = vadd.f32 %v1295, %v1327
    %s1336 = sld [smem:[#allocation8 + $0x2e]]
    %v1337 = vstv %s1336
    %v1338 = vmul.f32 %v1047, %v1337
    %v1339 = vmul.f32 %v1037, %v1337
    %v1340 = vmul.f32 %v1049, %v1337
    %v1341 = vmul.f32 %v1048, %v1337
    %v1342 = vmul.f32 %v1040, %v1337
    %v1343 = vmul.f32 %v1050, %v1337
    %v1350 = vrot.slane %v1338, 4
    %v1351 = vrot.slane %v1339, 4
    %v1352 = vsel %vm243, %v1350, %v1351
    %v1353 = vrot.slane %v1340, 4
    %v1354 = vsel %vm243, %v1351, %v1353
    %v1355 = vrot.slane %v1341, 4
    %v1356 = vrot.slane %v1342, 4
    %v1357 = vsel %vm243, %v1355, %v1356
    %v1358 = vrot.slane %v1343, 4
    %v1359 = vsel %vm243, %v1356, %v1358
    %1360 = vrot.lane.b32.xlu0 %v1352, 127
    %v1361 = vpop.permute.xlu0 %1360
    %1362 = vrot.lane.b32.xlu0 %v1354, 127
    %v1363 = vpop.permute.xlu0 %1362
    %1364 = vrot.lane.b32.xlu0 %v1357, 127
    %v1365 = vpop.permute.xlu0 %1364
    %1366 = vrot.lane.b32.xlu0 %v1359, 127
    %v1367 = vpop.permute.xlu0 %1366
    %v1372 = vadd.f32 %v1332, %v1361
    %v1373 = vadd.f32 %v1333, %v1363
    %v1374 = vadd.f32 %v1334, %v1365
    %v1375 = vadd.f32 %v1335, %v1367
    %s1376 = sld [smem:[#allocation8 + $0x1b]]
    %v1377 = vstv %s1376
    %v1378 = vmul.f32 %v1047, %v1377
    %v1379 = vmul.f32 %v1037, %v1377
    %v1380 = vmul.f32 %v1048, %v1377
    %v1381 = vmul.f32 %v1040, %v1377
    %1386 = vrot.lane.b32.xlu0 %v1378, 126
    %v1387 = vpop.permute.xlu0 %1386
    %1388 = vrot.lane.b32.xlu0 %v1379, 126
    %v1389 = vpop.permute.xlu0 %1388
    %1390 = vrot.lane.b32.xlu0 %v1380, 126
    %v1391 = vpop.permute.xlu0 %1390
    %1392 = vrot.lane.b32.xlu0 %v1381, 126
    %v1393 = vpop.permute.xlu0 %1392
    %v1398 = vadd.f32 %v1372, %v1387
    %v1399 = vadd.f32 %v1373, %v1389
    %v1400 = vadd.f32 %v1374, %v1391
    %v1401 = vadd.f32 %v1375, %v1393
    %s1402 = sld [smem:[#allocation8 + $0x20]]
    %v1403 = vstv %s1402
    %v1404 = vmul.f32 %v1047, %v1403
    %v1405 = vmul.f32 %v1037, %v1403
    %v1406 = vmul.f32 %v1049, %v1403
    %v1407 = vmul.f32 %v1048, %v1403
    %v1408 = vmul.f32 %v1040, %v1403
    %v1409 = vmul.f32 %v1050, %v1403
    %v1416 = vrot.slane %v1404, 1
    %v1417 = vrot.slane %v1405, 1
    %v1418 = vsel %vm144, %v1416, %v1417
    %v1419 = vrot.slane %v1406, 1
    %v1420 = vsel %vm144, %v1417, %v1419
    %v1421 = vrot.slane %v1407, 1
    %v1422 = vrot.slane %v1408, 1
    %v1423 = vsel %vm144, %v1421, %v1422
    %v1424 = vrot.slane %v1409, 1
    %v1425 = vsel %vm144, %v1422, %v1424
    %1426 = vrot.lane.b32.xlu0 %v1418, 126
    %v1427 = vpop.permute.xlu0 %1426
    %1428 = vrot.lane.b32.xlu0 %v1420, 126
    %v1429 = vpop.permute.xlu0 %1428
    %1430 = vrot.lane.b32.xlu0 %v1423, 126
    %v1431 = vpop.permute.xlu0 %1430
    %1432 = vrot.lane.b32.xlu0 %v1425, 126
    %v1433 = vpop.permute.xlu0 %1432
    %v1438 = vadd.f32 %v1398, %v1427
    %v1439 = vadd.f32 %v1399, %v1429
    %v1440 = vadd.f32 %v1400, %v1431
    %v1441 = vadd.f32 %v1401, %v1433
    %s1442 = sld [smem:[#allocation8 + $0x25]]
    %v1443 = vstv %s1442
    %v1444 = vmul.f32 %v1047, %v1443
    %v1445 = vmul.f32 %v1037, %v1443
    %v1446 = vmul.f32 %v1049, %v1443
    %v1447 = vmul.f32 %v1048, %v1443
    %v1448 = vmul.f32 %v1040, %v1443
    %v1449 = vmul.f32 %v1050, %v1443
    %v1456 = vrot.slane %v1444, 2
    %v1457 = vrot.slane %v1445, 2
    %v1458 = vsel %vm177, %v1456, %v1457
    %v1459 = vrot.slane %v1446, 2
    %v1460 = vsel %vm177, %v1457, %v1459
    %v1461 = vrot.slane %v1447, 2
    %v1462 = vrot.slane %v1448, 2
    %v1463 = vsel %vm177, %v1461, %v1462
    %v1464 = vrot.slane %v1449, 2
    %v1465 = vsel %vm177, %v1462, %v1464
    %1466 = vrot.lane.b32.xlu0 %v1458, 126
    %v1467 = vpop.permute.xlu0 %1466
    %1468 = vrot.lane.b32.xlu0 %v1460, 126
    %v1469 = vpop.permute.xlu0 %1468
    %1470 = vrot.lane.b32.xlu0 %v1463, 126
    %v1471 = vpop.permute.xlu0 %1470
    %1472 = vrot.lane.b32.xlu0 %v1465, 126
    %v1473 = vpop.permute.xlu0 %1472
    %v1478 = vadd.f32 %v1438, %v1467
    %v1479 = vadd.f32 %v1439, %v1469
    %v1480 = vadd.f32 %v1440, %v1471
    %v1481 = vadd.f32 %v1441, %v1473
    %s1482 = sld [smem:[#allocation8 + $0x2a]]
    %v1483 = vstv %s1482
    %v1484 = vmul.f32 %v1047, %v1483
    %v1485 = vmul.f32 %v1037, %v1483
    %v1486 = vmul.f32 %v1049, %v1483
    %v1487 = vmul.f32 %v1048, %v1483
    %v1488 = vmul.f32 %v1040, %v1483
    %v1489 = vmul.f32 %v1050, %v1483
    %v1496 = vrot.slane %v1484, 3
    %v1497 = vrot.slane %v1485, 3
    %v1498 = vsel %vm210, %v1496, %v1497
    %v1499 = vrot.slane %v1486, 3
    %v1500 = vsel %vm210, %v1497, %v1499
    %v1501 = vrot.slane %v1487, 3
    %v1502 = vrot.slane %v1488, 3
    %v1503 = vsel %vm210, %v1501, %v1502
    %v1504 = vrot.slane %v1489, 3
    %v1505 = vsel %vm210, %v1502, %v1504
    %1506 = vrot.lane.b32.xlu0 %v1498, 126
    %v1507 = vpop.permute.xlu0 %1506
    %1508 = vrot.lane.b32.xlu0 %v1500, 126
    %v1509 = vpop.permute.xlu0 %1508
    %1510 = vrot.lane.b32.xlu0 %v1503, 126
    %v1511 = vpop.permute.xlu0 %1510
    %1512 = vrot.lane.b32.xlu0 %v1505, 126
    %v1513 = vpop.permute.xlu0 %1512
    %v1518 = vadd.f32 %v1478, %v1507
    %v1519 = vadd.f32 %v1479, %v1509
    %v1520 = vadd.f32 %v1480, %v1511
    %v1521 = vadd.f32 %v1481, %v1513
    %s1522 = sld [smem:[#allocation8 + $0x2f]]
    %v1523 = vstv %s1522
    %v1524 = vmul.f32 %v1047, %v1523
    %v1525 = vmul.f32 %v1037, %v1523
    %v1526 = vmul.f32 %v1049, %v1523
    %v1527 = vmul.f32 %v1048, %v1523
    %v1528 = vmul.f32 %v1040, %v1523
    %v1529 = vmul.f32 %v1050, %v1523
    %v1536 = vrot.slane %v1524, 4
    %v1537 = vrot.slane %v1525, 4
    %v1538 = vsel %vm243, %v1536, %v1537
    %v1539 = vrot.slane %v1526, 4
    %v1540 = vsel %vm243, %v1537, %v1539
    %v1541 = vrot.slane %v1527, 4
    %v1542 = vrot.slane %v1528, 4
    %v1543 = vsel %vm243, %v1541, %v1542
    %v1544 = vrot.slane %v1529, 4
    %v1545 = vsel %vm243, %v1542, %v1544
    %1546 = vrot.lane.b32.xlu0 %v1538, 126
    %v1547 = vpop.permute.xlu0 %1546
    %1548 = vrot.lane.b32.xlu0 %v1540, 126
    %v1549 = vpop.permute.xlu0 %1548
    %1550 = vrot.lane.b32.xlu0 %v1543, 126
    %v1551 = vpop.permute.xlu0 %1550
    %1552 = vrot.lane.b32.xlu0 %v1545, 126
    %v1553 = vpop.permute.xlu0 %1552
    %v1558 = vadd.f32 %v1518, %v1547
    %v1559 = vadd.f32 %v1519, %v1549
    %v1560 = vadd.f32 %v1520, %v1551
    %v1561 = vadd.f32 %v1521, %v1553
    %s1562 = sld [smem:[#allocation8 + $0x1c]]
    %v1563 = vstv %s1562
    %v1564 = vmul.f32 %v1047, %v1563
    %v1565 = vmul.f32 %v1037, %v1563
    %v1566 = vmul.f32 %v1048, %v1563
    %v1567 = vmul.f32 %v1040, %v1563
    %1572 = vrot.lane.b32.xlu0 %v1564, 125
    %v1573 = vpop.permute.xlu0 %1572
    %1574 = vrot.lane.b32.xlu0 %v1565, 125
    %v1575 = vpop.permute.xlu0 %1574
    %1576 = vrot.lane.b32.xlu0 %v1566, 125
    %v1577 = vpop.permute.xlu0 %1576
    %1578 = vrot.lane.b32.xlu0 %v1567, 125
    %v1579 = vpop.permute.xlu0 %1578
    %v1584 = vadd.f32 %v1558, %v1573
    %v1585 = vadd.f32 %v1559, %v1575
    %v1586 = vadd.f32 %v1560, %v1577
    %v1587 = vadd.f32 %v1561, %v1579
    %s1588 = sld [smem:[#allocation8 + $0x21]]
    %v1589 = vstv %s1588
    %v1590 = vmul.f32 %v1047, %v1589
    %v1591 = vmul.f32 %v1037, %v1589
    %v1592 = vmul.f32 %v1049, %v1589
    %v1593 = vmul.f32 %v1048, %v1589
    %v1594 = vmul.f32 %v1040, %v1589
    %v1595 = vmul.f32 %v1050, %v1589
    %v1602 = vrot.slane %v1590, 1
    %v1603 = vrot.slane %v1591, 1
    %v1604 = vsel %vm144, %v1602, %v1603
    %v1605 = vrot.slane %v1592, 1
    %v1606 = vsel %vm144, %v1603, %v1605
    %v1607 = vrot.slane %v1593, 1
    %v1608 = vrot.slane %v1594, 1
    %v1609 = vsel %vm144, %v1607, %v1608
    %v1610 = vrot.slane %v1595, 1
    %v1611 = vsel %vm144, %v1608, %v1610
    %1612 = vrot.lane.b32.xlu0 %v1604, 125
    %v1613 = vpop.permute.xlu0 %1612
    %1614 = vrot.lane.b32.xlu0 %v1606, 125
    %v1615 = vpop.permute.xlu0 %1614
    %1616 = vrot.lane.b32.xlu0 %v1609, 125
    %v1617 = vpop.permute.xlu0 %1616
    %1618 = vrot.lane.b32.xlu0 %v1611, 125
    %v1619 = vpop.permute.xlu0 %1618
    %v1624 = vadd.f32 %v1584, %v1613
    %v1625 = vadd.f32 %v1585, %v1615
    %v1626 = vadd.f32 %v1586, %v1617
    %v1627 = vadd.f32 %v1587, %v1619
    %s1628 = sld [smem:[#allocation8 + $0x26]]
    %v1629 = vstv %s1628
    %v1630 = vmul.f32 %v1047, %v1629
    %v1631 = vmul.f32 %v1037, %v1629
    %v1632 = vmul.f32 %v1049, %v1629
    %v1633 = vmul.f32 %v1048, %v1629
    %v1634 = vmul.f32 %v1040, %v1629
    %v1635 = vmul.f32 %v1050, %v1629
    %v1642 = vrot.slane %v1630, 2
    %v1643 = vrot.slane %v1631, 2
    %v1644 = vsel %vm177, %v1642, %v1643
    %v1645 = vrot.slane %v1632, 2
    %v1646 = vsel %vm177, %v1643, %v1645
    %v1647 = vrot.slane %v1633, 2
    %v1648 = vrot.slane %v1634, 2
    %v1649 = vsel %vm177, %v1647, %v1648
    %v1650 = vrot.slane %v1635, 2
    %v1651 = vsel %vm177, %v1648, %v1650
    %1652 = vrot.lane.b32.xlu0 %v1644, 125
    %v1653 = vpop.permute.xlu0 %1652
    %1654 = vrot.lane.b32.xlu0 %v1646, 125
    %v1655 = vpop.permute.xlu0 %1654
    %1656 = vrot.lane.b32.xlu0 %v1649, 125
    %v1657 = vpop.permute.xlu0 %1656
    %1658 = vrot.lane.b32.xlu0 %v1651, 125
    %v1659 = vpop.permute.xlu0 %1658
    %v1664 = vadd.f32 %v1624, %v1653
    %v1665 = vadd.f32 %v1625, %v1655
    %v1666 = vadd.f32 %v1626, %v1657
    %v1667 = vadd.f32 %v1627, %v1659
    %s1668 = sld [smem:[#allocation8 + $0x2b]]
    %v1669 = vstv %s1668
    %v1670 = vmul.f32 %v1047, %v1669
    %v1671 = vmul.f32 %v1037, %v1669
    %v1672 = vmul.f32 %v1049, %v1669
    %v1673 = vmul.f32 %v1048, %v1669
    %v1674 = vmul.f32 %v1040, %v1669
    %v1675 = vmul.f32 %v1050, %v1669
    %v1682 = vrot.slane %v1670, 3
    %v1683 = vrot.slane %v1671, 3
    %v1684 = vsel %vm210, %v1682, %v1683
    %v1685 = vrot.slane %v1672, 3
    %v1686 = vsel %vm210, %v1683, %v1685
    %v1687 = vrot.slane %v1673, 3
    %v1688 = vrot.slane %v1674, 3
    %v1689 = vsel %vm210, %v1687, %v1688
    %v1690 = vrot.slane %v1675, 3
    %v1691 = vsel %vm210, %v1688, %v1690
    %1692 = vrot.lane.b32.xlu0 %v1684, 125
    %v1693 = vpop.permute.xlu0 %1692
    %1694 = vrot.lane.b32.xlu0 %v1686, 125
    %v1695 = vpop.permute.xlu0 %1694
    %1696 = vrot.lane.b32.xlu0 %v1689, 125
    %v1697 = vpop.permute.xlu0 %1696
    %1698 = vrot.lane.b32.xlu0 %v1691, 125
    %v1699 = vpop.permute.xlu0 %1698
    %v1704 = vadd.f32 %v1664, %v1693
    %v1705 = vadd.f32 %v1665, %v1695
    %v1706 = vadd.f32 %v1666, %v1697
    %v1707 = vadd.f32 %v1667, %v1699
    %s1708 = sld [smem:[#allocation8 + $0x30]]
    %v1709 = vstv %s1708
    %v1710 = vmul.f32 %v1047, %v1709
    %v1711 = vmul.f32 %v1037, %v1709
    %v1712 = vmul.f32 %v1049, %v1709
    %v1713 = vmul.f32 %v1048, %v1709
    %v1714 = vmul.f32 %v1040, %v1709
    %v1715 = vmul.f32 %v1050, %v1709
    %v1722 = vrot.slane %v1710, 4
    %v1723 = vrot.slane %v1711, 4
    %v1724 = vsel %vm243, %v1722, %v1723
    %v1725 = vrot.slane %v1712, 4
    %v1726 = vsel %vm243, %v1723, %v1725
    %v1727 = vrot.slane %v1713, 4
    %v1728 = vrot.slane %v1714, 4
    %v1729 = vsel %vm243, %v1727, %v1728
    %v1730 = vrot.slane %v1715, 4
    %v1731 = vsel %vm243, %v1728, %v1730
    %1732 = vrot.lane.b32.xlu0 %v1724, 125
    %v1733 = vpop.permute.xlu0 %1732
    %1734 = vrot.lane.b32.xlu0 %v1726, 125
    %v1735 = vpop.permute.xlu0 %1734
    %1736 = vrot.lane.b32.xlu0 %v1729, 125
    %v1737 = vpop.permute.xlu0 %1736
    %1738 = vrot.lane.b32.xlu0 %v1731, 125
    %v1739 = vpop.permute.xlu0 %1738
    %v1744 = vadd.f32 %v1704, %v1733
    %v1745 = vadd.f32 %v1705, %v1735
    %v1746 = vadd.f32 %v1706, %v1737
    %v1747 = vadd.f32 %v1707, %v1739
    %s1748 = sld [smem:[#allocation8 + $0x1d]]
    %v1749 = vstv %s1748
    %v1750 = vmul.f32 %v1047, %v1749
    %v1751 = vmul.f32 %v1037, %v1749
    %v1752 = vmul.f32 %v1048, %v1749
    %v1753 = vmul.f32 %v1040, %v1749
    %1758 = vrot.lane.b32.xlu0 %v1750, 124
    %v1759 = vpop.permute.xlu0 %1758
    %1760 = vrot.lane.b32.xlu0 %v1751, 124
    %v1761 = vpop.permute.xlu0 %1760
    %1762 = vrot.lane.b32.xlu0 %v1752, 124
    %v1763 = vpop.permute.xlu0 %1762
    %1764 = vrot.lane.b32.xlu0 %v1753, 124
    %v1765 = vpop.permute.xlu0 %1764
    %v1770 = vadd.f32 %v1744, %v1759
    %v1771 = vadd.f32 %v1745, %v1761
    %v1772 = vadd.f32 %v1746, %v1763
    %v1773 = vadd.f32 %v1747, %v1765
    %s1774 = sld [smem:[#allocation8 + $0x22]]
    %v1775 = vstv %s1774
    %v1776 = vmul.f32 %v1047, %v1775
    %v1777 = vmul.f32 %v1037, %v1775
    %v1778 = vmul.f32 %v1049, %v1775
    %v1779 = vmul.f32 %v1048, %v1775
    %v1780 = vmul.f32 %v1040, %v1775
    %v1781 = vmul.f32 %v1050, %v1775
    %v1788 = vrot.slane %v1776, 1
    %v1789 = vrot.slane %v1777, 1
    %v1790 = vsel %vm144, %v1788, %v1789
    %v1791 = vrot.slane %v1778, 1
    %v1792 = vsel %vm144, %v1789, %v1791
    %v1793 = vrot.slane %v1779, 1
    %v1794 = vrot.slane %v1780, 1
    %v1795 = vsel %vm144, %v1793, %v1794
    %v1796 = vrot.slane %v1781, 1
    %v1797 = vsel %vm144, %v1794, %v1796
    %1798 = vrot.lane.b32.xlu0 %v1790, 124
    %v1799 = vpop.permute.xlu0 %1798
    %1800 = vrot.lane.b32.xlu0 %v1792, 124
    %v1801 = vpop.permute.xlu0 %1800
    %1802 = vrot.lane.b32.xlu0 %v1795, 124
    %v1803 = vpop.permute.xlu0 %1802
    %1804 = vrot.lane.b32.xlu0 %v1797, 124
    %v1805 = vpop.permute.xlu0 %1804
    %v1810 = vadd.f32 %v1770, %v1799
    %v1811 = vadd.f32 %v1771, %v1801
    %v1812 = vadd.f32 %v1772, %v1803
    %v1813 = vadd.f32 %v1773, %v1805
    %s1814 = sld [smem:[#allocation8 + $0x27]]
    %v1815 = vstv %s1814
    %v1816 = vmul.f32 %v1047, %v1815
    %v1817 = vmul.f32 %v1037, %v1815
    %v1818 = vmul.f32 %v1049, %v1815
    %v1819 = vmul.f32 %v1048, %v1815
    %v1820 = vmul.f32 %v1040, %v1815
    %v1821 = vmul.f32 %v1050, %v1815
    %v1828 = vrot.slane %v1816, 2
    %v1829 = vrot.slane %v1817, 2
    %v1830 = vsel %vm177, %v1828, %v1829
    %v1831 = vrot.slane %v1818, 2
    %v1832 = vsel %vm177, %v1829, %v1831
    %v1833 = vrot.slane %v1819, 2
    %v1834 = vrot.slane %v1820, 2
    %v1835 = vsel %vm177, %v1833, %v1834
    %v1836 = vrot.slane %v1821, 2
    %v1837 = vsel %vm177, %v1834, %v1836
    %1838 = vrot.lane.b32.xlu0 %v1830, 124
    %v1839 = vpop.permute.xlu0 %1838
    %1840 = vrot.lane.b32.xlu0 %v1832, 124
    %v1841 = vpop.permute.xlu0 %1840
    %1842 = vrot.lane.b32.xlu0 %v1835, 124
    %v1843 = vpop.permute.xlu0 %1842
    %1844 = vrot.lane.b32.xlu0 %v1837, 124
    %v1845 = vpop.permute.xlu0 %1844
    %v1850 = vadd.f32 %v1810, %v1839
    %v1851 = vadd.f32 %v1811, %v1841
    %v1852 = vadd.f32 %v1812, %v1843
    %v1853 = vadd.f32 %v1813, %v1845
    %s1854 = sld [smem:[#allocation8 + $0x2c]]
    %v1855 = vstv %s1854
    %v1856 = vmul.f32 %v1047, %v1855
    %v1857 = vmul.f32 %v1037, %v1855
    %v1858 = vmul.f32 %v1049, %v1855
    %v1859 = vmul.f32 %v1048, %v1855
    %v1860 = vmul.f32 %v1040, %v1855
    %v1861 = vmul.f32 %v1050, %v1855
    %v1868 = vrot.slane %v1856, 3
    %v1869 = vrot.slane %v1857, 3
    %v1870 = vsel %vm210, %v1868, %v1869
    %v1871 = vrot.slane %v1858, 3
    %v1872 = vsel %vm210, %v1869, %v1871
    %v1873 = vrot.slane %v1859, 3
    %v1874 = vrot.slane %v1860, 3
    %v1875 = vsel %vm210, %v1873, %v1874
    %v1876 = vrot.slane %v1861, 3
    %v1877 = vsel %vm210, %v1874, %v1876
    %1878 = vrot.lane.b32.xlu0 %v1870, 124
    %v1879 = vpop.permute.xlu0 %1878
    %1880 = vrot.lane.b32.xlu0 %v1872, 124
    %v1881 = vpop.permute.xlu0 %1880
    %1882 = vrot.lane.b32.xlu0 %v1875, 124
    %v1883 = vpop.permute.xlu0 %1882
    %1884 = vrot.lane.b32.xlu0 %v1877, 124
    %v1885 = vpop.permute.xlu0 %1884
    %v1890 = vadd.f32 %v1850, %v1879
    %v1891 = vadd.f32 %v1851, %v1881
    %v1892 = vadd.f32 %v1852, %v1883
    %v1893 = vadd.f32 %v1853, %v1885
    %s1894 = sld [smem:[#allocation8 + $0x31]]
    %v1895 = vstv %s1894
    %v1896 = vmul.f32 %v1047, %v1895
    %v1897 = vmul.f32 %v1037, %v1895
    %v1898 = vmul.f32 %v1049, %v1895
    %v1899 = vmul.f32 %v1048, %v1895
    %v1900 = vmul.f32 %v1040, %v1895
    %v1901 = vmul.f32 %v1050, %v1895
    %v1908 = vrot.slane %v1896, 4
    %v1909 = vrot.slane %v1897, 4
    %v1910 = vsel %vm243, %v1908, %v1909
    %v1911 = vrot.slane %v1898, 4
    %v1912 = vsel %vm243, %v1909, %v1911
    %v1913 = vrot.slane %v1899, 4
    %v1914 = vrot.slane %v1900, 4
    %v1915 = vsel %vm243, %v1913, %v1914
    %v1916 = vrot.slane %v1901, 4
    %v1917 = vsel %vm243, %v1914, %v1916
    %1918 = vrot.lane.b32.xlu0 %v1910, 124
    %v1919 = vpop.permute.xlu0 %1918
    %1920 = vrot.lane.b32.xlu0 %v1912, 124
    %v1921 = vpop.permute.xlu0 %1920
    %1922 = vrot.lane.b32.xlu0 %v1915, 124
    %v1923 = vpop.permute.xlu0 %1922
    %1924 = vrot.lane.b32.xlu0 %v1917, 124
    %v1925 = vpop.permute.xlu0 %1924
    %v1930 = vadd.f32 %v1890, %v1919
    %v1931 = vadd.f32 %v1891, %v1921
    %v1932 = vadd.f32 %v1892, %v1923
    %v1933 = vadd.f32 %v1893, %v1925
    %vm1934 = vcmask 130048
    %1935 = vst.msk [vmem:[#allocation9] sm:$0xff] %vm1934, %v1002
    %1936 = vst.msk [vmem:[#allocation9 + $0x8] sm:$0xff] %vm1934, %v1003
    %1937 = vst.msk [vmem:[#allocation9 + $0x10] sm:$0xff] %vm1934, %v1004
    %1938 = vst.msk [vmem:[#allocation9 + $0x18] sm:$0xff] %vm1934, %v1005
    %1939 = vst.msk [vmem:[#allocation10] sm:$0xff] %vm1934, %v1930
    %1940 = vst.msk [vmem:[#allocation10 + $0x8] sm:$0xff] %vm1934, %v1931
    %1941 = vst.msk [vmem:[#allocation10 + $0x10] sm:$0xff] %vm1934, %v1932
    %1942 = vst.msk [vmem:[#allocation10 + $0x18] sm:$0xff] %vm1934, %v1933
    // Predicated region
    $region26: #{tpu_custom_call.1} parent=1 // pred_check
      _
    $region27: #{tpu_custom_call.1} parent=1 // pred_check_branch
      %1944 = sbr.rel (0) target = $region29
    $region28: #{tpu_custom_call.1} parent=1 // pred_region
      %1946 = vsyncadd [#allocation4], 0
      %s1947 = sshll.u32 [#allocation9], 4
      %s1948 = int_to_ptr.vmem [resolvable:$true] %s1947
      %s1949 = sshll.u32 %s3, 4
      %s1950 = int_to_ptr.hbm [resolvable:$true] %s1949
      %1955 = dma.vmem_to_hbm [thread:$0]  %s1948, 512, %s1950, [#allocation4], 128, 128, 8
    $region29: #{tpu_custom_call.1} parent=1 // pred_fallthru
      _
    // Predicated region
    $region30: #{tpu_custom_call.1} parent=1 // pred_check
      _
    $region31: #{tpu_custom_call.1} parent=1 // pred_check_branch
      %1957 = sbr.rel (0) target = $region33
    $region32: #{tpu_custom_call.1} parent=1 // pred_region
      %1959 = vsyncadd [#allocation11], 0
      %s1960 = sshll.u32 [#allocation10], 4
      %s1961 = int_to_ptr.vmem [resolvable:$true] %s1960
      %s1962 = sshll.u32 %s4, 4
      %s1963 = int_to_ptr.hbm [resolvable:$true] %s1962
      %1968 = dma.vmem_to_hbm [thread:$0]  %s1961, 512, %s1963, [#allocation11], 128, 128, 8
    $region33: #{tpu_custom_call.1} parent=1 // pred_fallthru
      _
    // Predicated region
    $region34: #{tpu_custom_call.1} parent=1 // pred_check
      _
    $region35: #{tpu_custom_call.1} parent=1 // pred_check_branch
      %1970 = sbr.rel (0) target = $region37
    $region36: #{tpu_custom_call.1} parent=1 // pred_region
      %1972 = dma.done [#allocation4], 512
    $region37: #{tpu_custom_call.1} parent=1 // pred_fallthru
      _
    // Predicated region
    $region38: #{tpu_custom_call.1} parent=1 // pred_check
      _
    $region39: #{tpu_custom_call.1} parent=1 // pred_check_branch
      %1974 = sbr.rel (0) target = $region41
    $region40: #{tpu_custom_call.1} parent=1 // pred_region
      %1976 = dma.done [#allocation11], 512
    $region41: #{tpu_custom_call.1} parent=1 // pred_fallthru
      _
    %1977 = vsyncpa [#allocation3], 1
    %1978 = vsyncpa [#allocation7], 1
    %1979 = vsyncpa [#allocation4], 1
    %1980 = vsyncpa [#allocation11], 1
    %1981 = vsyncpa [#allocation5], 1

</llo_original>
